<compile_context>
chip_gen: v7x
topology: tpu7x:2x2x1
jax: 0.10.0
libtpu: 0.0.40
codegen_flags: <defaults>
</compile_context>

<pallas_src>
import functools

import jax
import jax.numpy as jnp
from jax.experimental import pallas as pl
from jax.experimental.pallas import tpu as pltpu

EPS = 1e-5

# For output-row parity r (out_row = 2*i + r), the contributing kernel taps (kh) and the
# corresponding start row inside the zero-padded (pad=1) input:
#   r=0: kh=1 uses padded start 1, kh=3 uses padded start 0
#   r=1: kh=0 uses padded start 2, kh=2 uses padded start 1
# The identical table applies to columns (kw / padded col start).
_TAPS = {0: ((1, 1), (3, 0)), 1: ((0, 2), (2, 1))}   # parity -> ((k_idx, pad_start), ...)
_PARITIES = ((0, 0), (0, 1), (1, 0), (1, 1))          # output channel-block order p = 2*r + c


def _deconv_stats_kernel(x_ref, w_ref, b_ref, y_ref, stats_ref, xpad_ref):
    """Per batch element: ReLU + transposed conv as ONE fused matmul + bias; accumulate BN stats."""
    n = pl.program_id(0)
    _, H, W, Cin = x_ref.shape
    HW = H * W

    @pl.when(n == 0)
    def _init():
        xpad_ref[...] = jnp.zeros_like(xpad_ref)      # border stays zero for every later step
        stats_ref[...] = jnp.zeros_like(stats_ref)

    # ReLU once per batch element, written into the interior of the zero-padded scratch.
    xpad_ref[1:H + 1, 1:W + 1, :] = jnp.maximum(x_ref[0], 0.0)

    # The 9 distinct shifted windows, concatenated along K in row-major (rs, cs) order.
    xcat = jnp.concatenate(
        [xpad_ref[rs:rs + H, cs:cs + W, :].reshape(HW, Cin)
         for rs in range(3) for cs in range(3)], axis=1)                      # (HW, 9*Cin)

    # Single MXU matmul producing all 4 output parities at once (K = 9*Cin, N = 4*Cout).
    acc = jnp.dot(xcat, w_ref[...], preferred_element_type=jnp.float32) + b_ref[...]

    # Lane-dense store of the whole (HW, 4*Cout) tile.
    y_ref[0, :, :] = acc

    # BN batch statistics: per-channel-block sums; parity blocks folded later in the wrapper.
    s1 = jnp.sum(acc, axis=0, keepdims=True)                                  # (1, 4*Cout)
    s2 = jnp.sum(acc * acc, axis=0, keepdims=True)                            # (1, 4*Cout)
    stats_ref[...] = stats_ref[...] + jnp.concatenate([s1, s2], axis=0)


def _bn_apply_kernel(y_ref, scale_ref, shift_ref, o_ref):
    o_ref[...] = y_ref[...] * scale_ref[...] + shift_ref[...]


@functools.partial(jax.jit, static_argnames=("batch_norm",))
def deconv_block_forward(x_nchw, w, b, gamma, beta, batch_norm=True, eps=EPS):
    """x_nchw: (N, Cin, H, W); w: (Cin, Cout, 4, 4) PyTorch ConvTranspose2d layout."""
    N, Cin, H, W = x_nchw.shape
    Cout = w.shape[1]
    HW = H * W

    x_nhwc = jnp.transpose(x_nchw, (0, 2, 3, 1)).astype(jnp.float32)

    # Fused block-sparse weight (9*Cin, 4*Cout): K-block order is window index 3*rs + cs
    # (matching the kernel's concat order), output block p = 2*r + c.
    w_t = jnp.transpose(w, (2, 3, 0, 1)).astype(jnp.float32)          # (kH, kW, Cin, Cout)
    w9 = jnp.zeros((9, Cin, 4, Cout), jnp.float32)
    for p, (r, c) in enumerate(_PARITIES):
        for kh, rs in _TAPS[r]:
            for kw, cs in _TAPS[c]:
                w9 = w9.at[3 * rs + cs, :, p, :].set(w_t[kh, kw])
    w9 = w9.reshape(9 * Cin, 4 * Cout)
    b4 = jnp.tile(b.astype(jnp.float32), 4).reshape(1, 4 * Cout)

    # NOTE: on v6e/v7x, casting x_nhwc / w9 to bfloat16 here (f32 accumulation kept via
    # preferred_element_type) would halve VMEM/HBM traffic; kept f32 for exact f32 parity.

    # Explicit VMEM budget (per-step tiles + intermediates, generous headroom), clamped < 64 MiB.
    est = 4 * (2 * HW * Cin + 9 * Cin * 4 * Cout + 4 * Cout
               + 2 * HW * 4 * Cout + 2 * 4 * Cout
               + (H + 2) * (W + 2) * Cin + HW * 9 * Cin + 2 * HW * 4 * Cout)
    vmem_limit = int(min(max(2 * est, 32 * 2 ** 20), 56 * 2 ** 20))

    y_unnorm, stats = pl.pallas_call(
        _deconv_stats_kernel,
        out_shape=(jax.ShapeDtypeStruct((N, HW, 4 * Cout), jnp.float32),
                   jax.ShapeDtypeStruct((2, 4 * Cout), jnp.float32)),
        grid=(N,),
        in_specs=[
            pl.BlockSpec((1, H, W, Cin), lambda n: (n, 0, 0, 0)),
            pl.BlockSpec((9 * Cin, 4 * Cout), lambda n: (0, 0)),
            pl.BlockSpec((1, 4 * Cout), lambda n: (0, 0)),
        ],
        out_specs=(
            pl.BlockSpec((1, HW, 4 * Cout), lambda n: (n, 0, 0)),
            pl.BlockSpec((2, 4 * Cout), lambda n: (0, 0)),        # resident accumulator across N
        ),
        scratch_shapes=[pltpu.VMEM((H + 2, W + 2, Cin), jnp.float32)],
        compiler_params=pltpu.CompilerParams(
            dimension_semantics=("arbitrary",),                   # stats accumulate across N
            vmem_limit_bytes=vmem_limit),
    )(x_nhwc, w9, b4)

    if batch_norm:
        # BatchNorm2d (training-mode, biased batch statistics over N, 2H, 2W).
        stats_c = stats.reshape(2, 4, Cout).sum(axis=1)           # fold the 4 parity blocks
        count = float(N * 4 * HW)
        mean = stats_c[0] / count
        var = stats_c[1] / count - mean * mean
        var = jnp.maximum(var, 0.0)        # guard E[x^2]-E[x]^2 cancellation from going negative
        inv_std = jax.lax.rsqrt(var + eps)
        scale = gamma.astype(jnp.float32) * inv_std
        shift = beta.astype(jnp.float32) - mean * scale
        scale4 = jnp.tile(scale, 4).reshape(1, 1, 4 * Cout)
        shift4 = jnp.tile(shift, 4).reshape(1, 1, 4 * Cout)

        y_out = pl.pallas_call(
            _bn_apply_kernel,
            out_shape=jax.ShapeDtypeStruct((N, HW, 4 * Cout), jnp.float32),
            grid=(N,),
            in_specs=[
                pl.BlockSpec((1, HW, 4 * Cout), lambda n: (n, 0, 0)),
                pl.BlockSpec((1, 1, 4 * Cout), lambda n: (0, 0, 0)),
                pl.BlockSpec((1, 1, 4 * Cout), lambda n: (0, 0, 0)),
            ],
            out_specs=pl.BlockSpec((1, HW, 4 * Cout), lambda n: (n, 0, 0)),
            input_output_aliases={0: 0},                          # normalize in place
            compiler_params=pltpu.CompilerParams(
                dimension_semantics=("parallel",),                # megacore-shard the affine pass
                vmem_limit_bytes=vmem_limit),
        )(y_unnorm, scale4, shift4)
    else:
        y_out = y_unnorm

    # depth-to-space: (N, H*W, 4*Cout) -> NCHW; channel block p = 2*r + c is pixel (2h+r, 2w+c).
    out = y_out.reshape(N, H, W, 2, 2, Cout)
    out = jnp.transpose(out, (0, 5, 1, 3, 2, 4))
    return out.reshape(N, Cout, 2 * H, 2 * W)


def reference_forward(x, w, b, gamma, beta, eps=EPS):
    """Pure-JAX reference matching the PyTorch module (batch_norm=True, dropout=False)."""
    xr = jnp.maximum(x, 0.0)
    # ConvTranspose2d == conv over stride-dilated input with flipped, IO-swapped kernel, pad k-1-p=2
    w_conv = jnp.flip(w, axis=(2, 3)).transpose(1, 0, 2, 3)           # (Cout, Cin, kH, kW)
    y = jax.lax.conv_general_dilated(
        xr, w_conv, window_strides=(1, 1), padding=((2, 2), (2, 2)),
        lhs_dilation=(2, 2), rhs_dilation=(1, 1),
        dimension_numbers=("NCHW", "OIHW", "NCHW"))
    y = y + b[None, :, None, None]
    mean = y.mean(axis=(0, 2, 3), keepdims=True)
    var = ((y - mean) ** 2).mean(axis=(0, 2, 3), keepdims=True)
    return (y - mean) / jnp.sqrt(var + eps) * gamma[None, :, None, None] + beta[None, :, None, None]


if __name__ == "__main__":
    N, Cin, Cout, H, W = 2, 8, 32, 16, 16
    key = jax.random.PRNGKey(0)
    kx, kw, kb, kg, kbt = jax.random.split(key, 5)

    x = jax.random.normal(kx, (N, Cin, H, W), jnp.float32)
    w = 0.1 * jax.random.normal(kw, (Cin, Cout, 4, 4), jnp.float32)   # ConvTranspose2d weight
    b = 0.1 * jax.random.normal(kb, (Cout,), jnp.float32)
    gamma = 1.0 + 0.05 * jax.random.normal(kg, (Cout,), jnp.float32)  # BN weight
    beta = 0.05 * jax.random.normal(kbt, (Cout,), jnp.float32)        # BN bias

    out = jax.block_until_ready(deconv_block_forward(x, w, b, gamma, beta))
    ref = jax.block_until_ready(reference_forward(x, w, b, gamma, beta))

    assert out.shape == (N, Cout, 2 * H, 2 * W), out.shape
    err = float(jnp.max(jnp.abs(out - ref)))
    assert jnp.allclose(out, ref, rtol=1e-4, atol=1e-4), err
    print("KERNEL_OK")
</pallas_src>

<mosaic_0001>
module attributes {stable_mosaic.version = 11 : i64} {
  func.func @_deconv_stats_kernel(%arg0: i32, %arg1: memref<1x16x16x8xf32, #tpu.memory_space<vmem>>, %arg2: memref<72x128xf32, #tpu.memory_space<vmem>>, %arg3: memref<1x128xf32, #tpu.memory_space<vmem>>, %arg4: memref<1x256x128xf32, #tpu.memory_space<vmem>>, %arg5: memref<2x128xf32, #tpu.memory_space<vmem>>, %arg6: memref<18x18x8xf32, #tpu.memory_space<vmem>>) attributes {dimension_semantics = [#tpu.dimension_semantics<arbitrary>], iteration_bounds = array<i64: 2>, scalar_prefetch = 0 : i64, scratch_operands = 1 : i64, tpu.core_type = #tpu.core_type<tc>, window_params = [{transform_indices = @transform_0, window_bounds = array<i64: 1, 16, 16, 8>}, {pipeline_mode = #tpu.pipeline_mode<synchronous>, transform_indices = @transform_1, window_bounds = array<i64: 72, 128>}, {pipeline_mode = #tpu.pipeline_mode<synchronous>, transform_indices = @transform_2, window_bounds = array<i64: 1, 128>}, {transform_indices = @transform_3, window_bounds = array<i64: 1, 256, 128>}, {pipeline_mode = #tpu.pipeline_mode<synchronous>, transform_indices = @transform_4, window_bounds = array<i64: 2, 128>}]} {
    %c0_i32 = arith.constant 0 : i32
    %0 = arith.cmpi eq, %arg0, %c0_i32 : i32
    %1 = arith.extui %0 : i1 to i32
    %c0_i32_0 = arith.constant 0 : i32
    %2 = arith.cmpi ne, %1, %c0_i32_0 : i32
    scf.if %2 {
      %cst_46 = arith.constant 0.000000e+00 : f32
      %44 = vector.broadcast %cst_46 : f32 to vector<18x18x8xf32>
      %c0_47 = arith.constant 0 : index
      %c0_48 = arith.constant 0 : index
      %c0_49 = arith.constant 0 : index
      %45 = vector.load %arg6[%c0_47, %c0_48, %c0_49] : memref<18x18x8xf32, #tpu.memory_space<vmem>>, vector<18x18x8xf32>
      tpu.vector_store %arg6[%c0_47, %c0_48, %c0_49], %44 {strides = array<i32>} : memref<18x18x8xf32, #tpu.memory_space<vmem>>, vector<18x18x8xf32>,
      %cst_50 = arith.constant 0.000000e+00 : f32
      %46 = vector.broadcast %cst_50 : f32 to vector<2x128xf32>
      %c0_51 = arith.constant 0 : index
      %c0_52 = arith.constant 0 : index
      %47 = vector.load %arg5[%c0_51, %c0_52] : memref<2x128xf32, #tpu.memory_space<vmem>>, vector<2x128xf32>
      tpu.vector_store %arg5[%c0_51, %c0_52], %46 {strides = array<i32>} : memref<2x128xf32, #tpu.memory_space<vmem>>, vector<2x128xf32>,
    } else {
    }
    %c0 = arith.constant 0 : index
    %c0_1 = arith.constant 0 : index
    %c0_2 = arith.constant 0 : index
    %c0_3 = arith.constant 0 : index
    %3 = vector.load %arg1[%c0, %c0_1, %c0_2, %c0_3] : memref<1x16x16x8xf32, #tpu.memory_space<vmem>>, vector<1x16x16x8xf32>
    %4 = vector.shape_cast %3 : vector<1x16x16x8xf32> to vector<16x16x8xf32>
    %cst = arith.constant 0.000000e+00 : f32
    %5 = vector.broadcast %cst : f32 to vector<16x16x8xf32>
    %6 = arith.maximumf %4, %5 : vector<16x16x8xf32>
    %c1 = arith.constant 1 : index
    %c1_4 = arith.constant 1 : index
    %c0_5 = arith.constant 0 : index
    %7 = vector.load %arg6[%c1, %c1_4, %c0_5] : memref<18x18x8xf32, #tpu.memory_space<vmem>>, vector<16x16x8xf32>
    tpu.vector_store %arg6[%c1, %c1_4, %c0_5], %6 {strides = array<i32>} : memref<18x18x8xf32, #tpu.memory_space<vmem>>, vector<16x16x8xf32>,
    %c0_6 = arith.constant 0 : index
    %c0_7 = arith.constant 0 : index
    %c0_8 = arith.constant 0 : index
    %8 = vector.load %arg6[%c0_6, %c0_7, %c0_8] : memref<18x18x8xf32, #tpu.memory_space<vmem>>, vector<16x16x8xf32>
    %9 = vector.shape_cast %8 : vector<16x16x8xf32> to vector<256x8xf32>
    %c0_9 = arith.constant 0 : index
    %c1_10 = arith.constant 1 : index
    %c0_11 = arith.constant 0 : index
    %10 = vector.load %arg6[%c0_9, %c1_10, %c0_11] : memref<18x18x8xf32, #tpu.memory_space<vmem>>, vector<16x16x8xf32>
    %11 = vector.shape_cast %10 : vector<16x16x8xf32> to vector<256x8xf32>
    %c0_12 = arith.constant 0 : index
    %c2 = arith.constant 2 : index
    %c0_13 = arith.constant 0 : index
    %12 = vector.load %arg6[%c0_12, %c2, %c0_13] : memref<18x18x8xf32, #tpu.memory_space<vmem>>, vector<16x16x8xf32>
    %13 = vector.shape_cast %12 : vector<16x16x8xf32> to vector<256x8xf32>
    %c1_14 = arith.constant 1 : index
    %c0_15 = arith.constant 0 : index
    %c0_16 = arith.constant 0 : index
    %14 = vector.load %arg6[%c1_14, %c0_15, %c0_16] : memref<18x18x8xf32, #tpu.memory_space<vmem>>, vector<16x16x8xf32>
    %15 = vector.shape_cast %14 : vector<16x16x8xf32> to vector<256x8xf32>
    %c1_17 = arith.constant 1 : index
    %c1_18 = arith.constant 1 : index
    %c0_19 = arith.constant 0 : index
    %16 = vector.load %arg6[%c1_17, %c1_18, %c0_19] : memref<18x18x8xf32, #tpu.memory_space<vmem>>, vector<16x16x8xf32>
    %17 = vector.shape_cast %16 : vector<16x16x8xf32> to vector<256x8xf32>
    %c1_20 = arith.constant 1 : index
    %c2_21 = arith.constant 2 : index
    %c0_22 = arith.constant 0 : index
    %18 = vector.load %arg6[%c1_20, %c2_21, %c0_22] : memref<18x18x8xf32, #tpu.memory_space<vmem>>, vector<16x16x8xf32>
    %19 = vector.shape_cast %18 : vector<16x16x8xf32> to vector<256x8xf32>
    %c2_23 = arith.constant 2 : index
    %c0_24 = arith.constant 0 : index
    %c0_25 = arith.constant 0 : index
    %20 = vector.load %arg6[%c2_23, %c0_24, %c0_25] : memref<18x18x8xf32, #tpu.memory_space<vmem>>, vector<16x16x8xf32>
    %21 = vector.shape_cast %20 : vector<16x16x8xf32> to vector<256x8xf32>
    %c2_26 = arith.constant 2 : index
    %c1_27 = arith.constant 1 : index
    %c0_28 = arith.constant 0 : index
    %22 = vector.load %arg6[%c2_26, %c1_27, %c0_28] : memref<18x18x8xf32, #tpu.memory_space<vmem>>, vector<16x16x8xf32>
    %23 = vector.shape_cast %22 : vector<16x16x8xf32> to vector<256x8xf32>
    %c2_29 = arith.constant 2 : index
    %c2_30 = arith.constant 2 : index
    %c0_31 = arith.constant 0 : index
    %24 = vector.load %arg6[%c2_29, %c2_30, %c0_31] : memref<18x18x8xf32, #tpu.memory_space<vmem>>, vector<16x16x8xf32>
    %25 = vector.shape_cast %24 : vector<16x16x8xf32> to vector<256x8xf32>
    %26 = tpu.concatenate %9, %11, %13, %15, %17, %19, %21, %23, %25 in 1 : vector<256x8xf32>, vector<256x8xf32>, vector<256x8xf32>, vector<256x8xf32>, vector<256x8xf32>, vector<256x8xf32>, vector<256x8xf32>, vector<256x8xf32>, vector<256x8xf32> -> vector<256x72xf32>
    %c0_32 = arith.constant 0 : index
    %c0_33 = arith.constant 0 : index
    %27 = vector.load %arg2[%c0_32, %c0_33] : memref<72x128xf32, #tpu.memory_space<vmem>>, vector<72x128xf32>
    %cst_34 = arith.constant dense<0.000000e+00> : vector<256x128xf32>
    %28 = tpu.matmul %26, %27, %cst_34 {dimension_numbers = #tpu.dot_dimension_numbers<[1], [0], [0], [1], [0, 0, 1, 1], [], []>} : vector<256x72xf32>, vector<72x128xf32>, vector<256x128xf32> -> vector<256x128xf32>
    %c0_35 = arith.constant 0 : index
    %c0_36 = arith.constant 0 : index
    %29 = vector.load %arg3[%c0_35, %c0_36] : memref<1x128xf32, #tpu.memory_space<vmem>>, vector<1x128xf32>
    %30 = vector.broadcast %29 : vector<1x128xf32> to vector<256x128xf32>
    %31 = arith.addf %28, %30 : vector<256x128xf32>
    %c0_37 = arith.constant 0 : index
    %c0_38 = arith.constant 0 : index
    %c0_39 = arith.constant 0 : index
    %32 = vector.load %arg4[%c0_37, %c0_38, %c0_39] : memref<1x256x128xf32, #tpu.memory_space<vmem>>, vector<1x256x128xf32>
    %33 = vector.shape_cast %32 : vector<1x256x128xf32> to vector<256x128xf32>
    %34 = vector.shape_cast %31 : vector<256x128xf32> to vector<1x256x128xf32>
    tpu.vector_store %arg4[%c0_37, %c0_38, %c0_39], %34 {strides = array<i32>} : memref<1x256x128xf32, #tpu.memory_space<vmem>>, vector<1x256x128xf32>,
    %cst_40 = arith.constant dense<0.000000e+00> : vector<128xf32>
    %35 = vector.multi_reduction <add>, %31, %cst_40 [0] : vector<256x128xf32> to vector<128xf32>
    %36 = vector.shape_cast %35 : vector<128xf32> to vector<1x128xf32>
    %37 = arith.mulf %31, %31 : vector<256x128xf32>
    %cst_41 = arith.constant dense<0.000000e+00> : vector<128xf32>
    %38 = vector.multi_reduction <add>, %37, %cst_41 [0] : vector<256x128xf32> to vector<128xf32>
    %39 = vector.shape_cast %38 : vector<128xf32> to vector<1x128xf32>
    %c0_42 = arith.constant 0 : index
    %c0_43 = arith.constant 0 : index
    %40 = vector.load %arg5[%c0_42, %c0_43] : memref<2x128xf32, #tpu.memory_space<vmem>>, vector<2x128xf32>
    %41 = tpu.concatenate %36, %39 in 0 : vector<1x128xf32>, vector<1x128xf32> -> vector<2x128xf32>
    %42 = arith.addf %40, %41 : vector<2x128xf32>
    %c0_44 = arith.constant 0 : index
    %c0_45 = arith.constant 0 : index
    %43 = vector.load %arg5[%c0_44, %c0_45] : memref<2x128xf32, #tpu.memory_space<vmem>>, vector<2x128xf32>
    tpu.vector_store %arg5[%c0_44, %c0_45], %42 {strides = array<i32>} : memref<2x128xf32, #tpu.memory_space<vmem>>, vector<2x128xf32>,
    return
  }
  func.func @transform_0(%arg0: i32) -> (i32, i32, i32, i32) {
    %c0_i32 = arith.constant 0 : i32
    %c0_i32_0 = arith.constant 0 : i32
    %c0_i32_1 = arith.constant 0 : i32
    %c0_i32_2 = arith.constant 0 : i32
    return %arg0, %c0_i32, %c0_i32_0, %c0_i32_1 : i32, i32, i32, i32
  }
  func.func @transform_1(%arg0: i32) -> (i32, i32) {
    %c0_i32 = arith.constant 0 : i32
    %c0_i32_0 = arith.constant 0 : i32
    %c0_i32_1 = arith.constant 0 : i32
    return %c0_i32, %c0_i32_0 : i32, i32
  }
  func.func @transform_2(%arg0: i32) -> (i32, i32) {
    %c0_i32 = arith.constant 0 : i32
    %c0_i32_0 = arith.constant 0 : i32
    %c0_i32_1 = arith.constant 0 : i32
    return %c0_i32, %c0_i32_0 : i32, i32
  }
  func.func @transform_3(%arg0: i32) -> (i32, i32, i32) {
    %c0_i32 = arith.constant 0 : i32
    %c0_i32_0 = arith.constant 0 : i32
    %c0_i32_1 = arith.constant 0 : i32
    return %arg0, %c0_i32, %c0_i32_0 : i32, i32, i32
  }
  func.func @transform_4(%arg0: i32) -> (i32, i32) {
    %c0_i32 = arith.constant 0 : i32
    %c0_i32_0 = arith.constant 0 : i32
    %c0_i32_1 = arith.constant 0 : i32
    return %c0_i32, %c0_i32_0 : i32, i32
  }
}

module attributes {stable_mosaic.version = 11 : i64} {
  func.func @_bn_apply_kernel(%arg0: i32, %arg1: memref<1x256x128xf32, #tpu.memory_space<vmem>>, %arg2: memref<1x1x128xf32, #tpu.memory_space<vmem>>, %arg3: memref<1x1x128xf32, #tpu.memory_space<vmem>>, %arg4: memref<1x256x128xf32, #tpu.memory_space<vmem>>) attributes {dimension_semantics = [#tpu.dimension_semantics<parallel>], iteration_bounds = array<i64: 2>, scalar_prefetch = 0 : i64, scratch_operands = 0 : i64, tpu.core_type = #tpu.core_type<tc>, window_params = [{transform_indices = @transform_0, window_bounds = array<i64: 1, 256, 128>}, {pipeline_mode = #tpu.pipeline_mode<synchronous>, transform_indices = @transform_1, window_bounds = array<i64: 1, 1, 128>}, {pipeline_mode = #tpu.pipeline_mode<synchronous>, transform_indices = @transform_2, window_bounds = array<i64: 1, 1, 128>}, {transform_indices = @transform_3, window_bounds = array<i64: 1, 256, 128>}]} {
    %c0 = arith.constant 0 : index
    %c0_0 = arith.constant 0 : index
    %c0_1 = arith.constant 0 : index
    %0 = vector.load %arg1[%c0, %c0_0, %c0_1] : memref<1x256x128xf32, #tpu.memory_space<vmem>>, vector<1x256x128xf32>
    %c0_2 = arith.constant 0 : index
    %c0_3 = arith.constant 0 : index
    %c0_4 = arith.constant 0 : index
    %1 = vector.load %arg2[%c0_2, %c0_3, %c0_4] : memref<1x1x128xf32, #tpu.memory_space<vmem>>, vector<1x1x128xf32>
    %2 = vector.broadcast %1 : vector<1x1x128xf32> to vector<1x256x128xf32>
    %3 = arith.mulf %0, %2 : vector<1x256x128xf32>
    %c0_5 = arith.constant 0 : index
    %c0_6 = arith.constant 0 : index
    %c0_7 = arith.constant 0 : index
    %4 = vector.load %arg3[%c0_5, %c0_6, %c0_7] : memref<1x1x128xf32, #tpu.memory_space<vmem>>, vector<1x1x128xf32>
    %5 = vector.broadcast %4 : vector<1x1x128xf32> to vector<1x256x128xf32>
    %6 = arith.addf %3, %5 : vector<1x256x128xf32>
    %c0_8 = arith.constant 0 : index
    %c0_9 = arith.constant 0 : index
    %c0_10 = arith.constant 0 : index
    %7 = vector.load %arg4[%c0_8, %c0_9, %c0_10] : memref<1x256x128xf32, #tpu.memory_space<vmem>>, vector<1x256x128xf32>
    tpu.vector_store %arg4[%c0_8, %c0_9, %c0_10], %6 {strides = array<i32>} : memref<1x256x128xf32, #tpu.memory_space<vmem>>, vector<1x256x128xf32>,
    return
  }
  func.func @transform_0(%arg0: i32) -> (i32, i32, i32) {
    %c0_i32 = arith.constant 0 : i32
    %c0_i32_0 = arith.constant 0 : i32
    %c0_i32_1 = arith.constant 0 : i32
    return %arg0, %c0_i32, %c0_i32_0 : i32, i32, i32
  }
  func.func @transform_1(%arg0: i32) -> (i32, i32, i32) {
    %c0_i32 = arith.constant 0 : i32
    %c0_i32_0 = arith.constant 0 : i32
    %c0_i32_1 = arith.constant 0 : i32
    %c0_i32_2 = arith.constant 0 : i32
    return %c0_i32, %c0_i32_0, %c0_i32_1 : i32, i32, i32
  }
  func.func @transform_2(%arg0: i32) -> (i32, i32, i32) {
    %c0_i32 = arith.constant 0 : i32
    %c0_i32_0 = arith.constant 0 : i32
    %c0_i32_1 = arith.constant 0 : i32
    %c0_i32_2 = arith.constant 0 : i32
    return %c0_i32, %c0_i32_0, %c0_i32_1 : i32, i32, i32
  }
  func.func @transform_3(%arg0: i32) -> (i32, i32, i32) {
    %c0_i32 = arith.constant 0 : i32
    %c0_i32_0 = arith.constant 0 : i32
    %c0_i32_1 = arith.constant 0 : i32
    return %arg0, %c0_i32, %c0_i32_0 : i32, i32, i32
  }
}

</mosaic_0001>

<llo_original>
// kernel: tile.18
$region0: #{tile.18}
  #allocation0 [shape = 's32[1]{0}', space=sflag, size = 0x4, scoped, tag = 'scoped memory for tile.18']
  %s0 = inlined_call_operand.vmem [shape: f32[32], index: 0, kind: input, shape index: {}]
  %s1 = inlined_call_operand.vmem [shape: f32[4,32], index: 1, kind: output, shape index: {}]
  // Predicated region
  $region2: #{tile.18} parent=0 // pred_check
    _
  $region3: #{tile.18} parent=0 // pred_check_branch
    %3 = sbr.rel (0) target = $region5
  $region4: #{tile.18} parent=0 // pred_region
    _
  $region5: #{tile.18} parent=0 // pred_fallthru
    _
  %v4 = vld [vmem:[%s0] ss:$0 sm:$0xff]
  %5 = vst [vmem:[%s1] sm:$0xf] %v4

// kernel: tile.19
$region0: #{tile.19}
  %s0 = inlined_call_operand.vmem [shape: f32[4,32], index: 0, kind: input, shape index: {}]
  %s1 = inlined_call_operand.vmem [shape: f32[1,128], index: 1, kind: output, shape index: {}]
  $region1: #{tile.19} parent=0
    #allocation0 [shape = 'u8[4096]{0}', space=vmem, size = 0x1000, scoped, tag = 'scoped mem for output reshape']
    #allocation1 [shape = 'u8[4096]{0}', space=vmem, size = 0x1000, scoped, tag = 'scoped mem for input reshape']
    %s3 = sshllo.u32 0, 4
    %v4 = vld [vmem:[%s0] sm:%s3]
    %5 = vst [vmem:[#allocation1] sm:%s3] %v4
    %v6 = vld [vmem:[#allocation1] sm:$0x1]
    %vm7 = vcmask 261120
    %8 = vst.msk [vmem:[#allocation0] sm:$0x1] %vm7, %v6
    %s9 = scalar_lea.vmem [#allocation1], 3
    %v10 = vld [vmem:[%s9] sm:$0x1]
    %11 = vrot.lane.b32.xlu0 %v10, 96
    %v12 = vpop.permute.xlu0 %11
    %vm13 = vcmask 1048320
    %14 = vst.msk [vmem:[#allocation0] sm:$0x1] %vm13, %v12
    %s15 = scalar_lea.vmem [#allocation1], 2
    %v16 = vld [vmem:[%s15] sm:$0x1]
    %17 = vrot.lane.b32.xlu0 %v16, 64
    %v18 = vpop.permute.xlu0 %17
    %vm19 = vcmask 785920
    %20 = vst.msk [vmem:[#allocation0] sm:$0x1] %vm19, %v18
    %s21 = scalar_lea.vmem [#allocation1], 1
    %v22 = vld [vmem:[%s21] sm:$0x1]
    %23 = vrot.lane.b32.xlu0 %v22, 32
    %v24 = vpop.permute.xlu0 %23
    %vm25 = vcmask 523520
    %26 = vst.msk [vmem:[#allocation0] sm:$0x1] %vm25, %v24
    %s28 = sshllo.u32 0, 1
    %v30 = vld [vmem:[#allocation0] sm:%s28]
    %s31 = sshllo.u32 0, 1
    %32 = vst [vmem:[%s1] sm:%s31] %v30

// kernel: tile.29
$region0: #{tile.29}
  %s0 = inlined_call_operand.vmem [shape: f32[4,32], index: 0, kind: input, shape index: {}]
  %s1 = inlined_call_operand.vmem [shape: f32[1,1,128], index: 1, kind: output, shape index: {}]
  $region1: #{tile.29} parent=0
    #allocation0 [shape = 'u8[4096]{0}', space=vmem, size = 0x1000, scoped, tag = 'scoped mem for output reshape']
    #allocation1 [shape = 'u8[4096]{0}', space=vmem, size = 0x1000, scoped, tag = 'scoped mem for input reshape']
    %s3 = sshllo.u32 0, 4
    %v4 = vld [vmem:[%s0] sm:%s3]
    %5 = vst [vmem:[#allocation1] sm:%s3] %v4
    %v6 = vld [vmem:[#allocation1] sm:$0x1]
    %vm7 = vcmask 261120
    %8 = vst.msk [vmem:[#allocation0] sm:$0x1] %vm7, %v6
    %s9 = scalar_lea.vmem [#allocation1], 3
    %v10 = vld [vmem:[%s9] sm:$0x1]
    %11 = vrot.lane.b32.xlu0 %v10, 96
    %v12 = vpop.permute.xlu0 %11
    %vm13 = vcmask 1048320
    %14 = vst.msk [vmem:[#allocation0] sm:$0x1] %vm13, %v12
    %s15 = scalar_lea.vmem [#allocation1], 2
    %v16 = vld [vmem:[%s15] sm:$0x1]
    %17 = vrot.lane.b32.xlu0 %v16, 64
    %v18 = vpop.permute.xlu0 %17
    %vm19 = vcmask 785920
    %20 = vst.msk [vmem:[#allocation0] sm:$0x1] %vm19, %v18
    %s21 = scalar_lea.vmem [#allocation1], 1
    %v22 = vld [vmem:[%s21] sm:$0x1]
    %23 = vrot.lane.b32.xlu0 %v22, 32
    %v24 = vpop.permute.xlu0 %23
    %vm25 = vcmask 523520
    %26 = vst.msk [vmem:[#allocation0] sm:$0x1] %vm25, %v24
    %s28 = sshllo.u32 0, 1
    %v30 = vld [vmem:[#allocation0] sm:%s28]
    %s31 = sshllo.u32 0, 1
    %32 = vst [vmem:[%s1] sm:%s31] %v30

// kernel: deconv_block_forward.3
$region0: #{deconv_block_forward.3}
  #allocation0 [shape = 'u32[]', space=smem, size = 0x4, offset = 0x4, fixed_abs, tag = 'smem constant byte address 0x4 - core index']
  #allocation1 [shape = 'u32[144,128]{1,0:T(1,128)}', space=vmem, size = 0x12000, scoped, tag = 'internal scratch']
  %s0 = inlined_call_operand.vmem [shape: f32[2,256,128], index: 0, kind: input, shape index: {}, may-alias: {0,3}]
  %s1 = inlined_call_operand.vmem [shape: f32[1,1,128], index: 1, kind: input, shape index: {}]
  %s2 = inlined_call_operand.vmem [shape: f32[1,1,128], index: 2, kind: input, shape index: {}]
  %s3 = inlined_call_operand.vmem [shape: f32[2,256,128], index: 3, kind: output, shape index: {}, may-alias: {0,3}]
  %s4 = sld [smem:[#allocation0]]
  $region45: #{deconv_block_forward.3} parent=0
    _
  %s6 = ssub.s32 1, %s4
  %s7 = scalar_select 0, %s6, %s4
  loop: start=0, step=1, limit=4
  $region2: #{deconv_block_forward.3} parent=0 // loop_pre_header
    _
  $region3: #{deconv_block_forward.3} parent=0 // loop_header
    %s9 = sphi 0, %s13
    %p10 = scmp.ge.s32.totalorder %s9, 4
    %s19 = sphi 0, %s21
    %s22 = sphi 0, %s19
    %s23 = sphi 0, %s22
    %s39 = sphi 0, %s23
    %s43 = sphi 0, %s43
    %s45 = sphi 0, %s43
    %s46 = sphi 0, %s45
    %s60 = sphi 0, %s46
    %s64 = sphi 0, %s64
    %s66 = sphi 0, %s64
    %s67 = sphi 0, %s66
    %s81 = sphi 0, %s67
    %s87 = sphi 0, %s89
    %s90 = sphi 0, %s87
    %s91 = sphi 0, %s90
    %s107 = sphi 0, %s91
  $region4: #{deconv_block_forward.3} parent=0 // loop_header_branch
    %12 = sbr.rel (%p10) target = $region8
  $region5: #{deconv_block_forward.3} parent=0 // loop_body
    %s14 = ssub.s32 %s9, 1
    %s15 = ssub.s32 %s9, 2
    %s16 = sadd.s32 %s9, 1
    %s17 = ssub.s32 %s9, %s16
    %p18 = scmp.eq.s32.totalorder %s17, 0
    %s20 = sadd.s32 %s19, 1
    %s21 = scalar_select %p18, %s19, %s20
    %p24 = pneg %p18
    %p25 = scmp.eq.s32.totalorder %s9, 1
    %p26 = por %p24, %p25
    %p27 = scmp.ne.s32.totalorder %s19, %s22
    %p28 = scmp.eq.s32.totalorder %s9, 0
    %p29 = por %p27, %p28
    %p30 = scmp.ne.s32.totalorder %s19, %s22
    %p31 = scmp.eq.s32.totalorder %s14, 1
    %p32 = por %p30, %p31
    %p33 = scmp.ne.s32.totalorder %s22, %s23
    %p34 = scmp.eq.s32.totalorder %s14, 0
    %p35 = por %p33, %p34
    %p36 = scmp.ne.s32.totalorder %s22, %s23
    %p37 = scmp.eq.s32.totalorder %s15, 1
    %p38 = por %p36, %p37
    %p40 = scmp.ne.s32.totalorder %s23, %s39
    %p41 = scmp.eq.s32.totalorder %s15, 0
    %p42 = por %p40, %p41
    %s44 = sadd.s32 %s43, 1
    %p47 = scmp.eq.s32.totalorder %s9, 1
    %p48 = scmp.ne.s32.totalorder %s43, %s45
    %p49 = scmp.eq.s32.totalorder %s9, 0
    %p50 = por %p48, %p49
    %p51 = scmp.ne.s32.totalorder %s43, %s45
    %p52 = scmp.eq.s32.totalorder %s14, 1
    %p53 = por %p51, %p52
    %p54 = scmp.ne.s32.totalorder %s45, %s46
    %p55 = scmp.eq.s32.totalorder %s14, 0
    %p56 = por %p54, %p55
    %p57 = scmp.ne.s32.totalorder %s45, %s46
    %p58 = scmp.eq.s32.totalorder %s15, 1
    %p59 = por %p57, %p58
    %p61 = scmp.ne.s32.totalorder %s46, %s60
    %p62 = scmp.eq.s32.totalorder %s15, 0
    %p63 = por %p61, %p62
    %s65 = sadd.s32 %s64, 1
    %p68 = scmp.eq.s32.totalorder %s9, 1
    %p69 = scmp.ne.s32.totalorder %s64, %s66
    %p70 = scmp.eq.s32.totalorder %s9, 0
    %p71 = por %p69, %p70
    %p72 = scmp.ne.s32.totalorder %s64, %s66
    %p73 = scmp.eq.s32.totalorder %s14, 1
    %p74 = por %p72, %p73
    %p75 = scmp.ne.s32.totalorder %s66, %s67
    %p76 = scmp.eq.s32.totalorder %s14, 0
    %p77 = por %p75, %p76
    %p78 = scmp.ne.s32.totalorder %s66, %s67
    %p79 = scmp.eq.s32.totalorder %s15, 1
    %p80 = por %p78, %p79
    %p82 = scmp.ne.s32.totalorder %s67, %s81
    %p83 = scmp.eq.s32.totalorder %s15, 0
    %p84 = por %p82, %p83
    %s85 = ssub.s32 %s9, %s16
    %p86 = scmp.eq.s32.totalorder %s85, 0
    %s88 = sadd.s32 %s87, 1
    %s89 = scalar_select %p86, %s87, %s88
    %p92 = pneg %p86
    %p93 = scmp.eq.s32.totalorder %s9, 1
    %p94 = por %p92, %p93
    %p95 = scmp.ne.s32.totalorder %s87, %s90
    %p96 = scmp.eq.s32.totalorder %s9, 0
    %p97 = por %p95, %p96
    %p98 = scmp.ne.s32.totalorder %s87, %s90
    %p99 = scmp.eq.s32.totalorder %s14, 1
    %p100 = por %p98, %p99
    %p101 = scmp.ne.s32.totalorder %s90, %s91
    %p102 = scmp.eq.s32.totalorder %s14, 0
    %p103 = por %p101, %p102
    %p104 = scmp.ne.s32.totalorder %s90, %s91
    %p105 = scmp.eq.s32.totalorder %s15, 1
    %p106 = por %p104, %p105
    %p108 = scmp.ne.s32.totalorder %s91, %s107
    %p109 = scmp.eq.s32.totalorder %s15, 0
    %p110 = por %p108, %p109
    %p111 = scmp.le.s32.totalorder 1, %s9
    %p112 = scmp.lt.s32.totalorder %s9, 3
    %p113 = pnand %p111, %p112
    %p114 = pneg %p113
    // Predicated region
    $region9: #{deconv_block_forward.3} parent=5 // pred_check
      _
    $region10: #{deconv_block_forward.3} parent=5 // pred_check_branch
      %116 = sbr.rel (%p113) target = $region12
    $region11: #{deconv_block_forward.3} parent=5 // pred_region
      %s117 = ssub.s32 %s9, 1
      // Predicated region
      $region13: #{deconv_block_forward.3} parent=11 // pred_check
        %p118 = pneg %p56
      $region14: #{deconv_block_forward.3} parent=11 // pred_check_branch
        %120 = sbr.rel (%p118) target = $region16
      $region15: #{deconv_block_forward.3} parent=11 // pred_region
        _
      $region16: #{deconv_block_forward.3} parent=11 // pred_fallthru
        _
      // Predicated region
      $region17: #{deconv_block_forward.3} parent=11 // pred_check
        %p121 = pneg %p77
      $region18: #{deconv_block_forward.3} parent=11 // pred_check_branch
        %123 = sbr.rel (%p121) target = $region20
      $region19: #{deconv_block_forward.3} parent=11 // pred_region
        _
      $region20: #{deconv_block_forward.3} parent=11 // pred_fallthru
        _
    $region12: #{deconv_block_forward.3} parent=5 // pred_fallthru
      _
    %p124 = scmp.lt.s32.totalorder %s9, 2
    // Predicated region
    $region21: #{deconv_block_forward.3} parent=5 // pred_check
      %p125 = pneg %p124
    $region22: #{deconv_block_forward.3} parent=5 // pred_check_branch
      %127 = sbr.rel (%p125) target = $region24
    $region23: #{deconv_block_forward.3} parent=5 // pred_region
      // Predicated region
      $region25: #{deconv_block_forward.3} parent=23 // pred_check
        %p128 = pneg %p29
      $region26: #{deconv_block_forward.3} parent=23 // pred_check_branch
        %130 = sbr.rel (%p128) target = $region28
      $region27: #{deconv_block_forward.3} parent=23 // pred_region
        %p131 = scmp.lt.s32.totalorder %s9, 1
        %s132 = scalar_select %p131, %s9, 1
        %s133 = smul.addr %s132, 32
        %s134 = smul.addr %s133, 8
        %s135 = scalar_lea.vmem %s0, %s134
      $region28: #{deconv_block_forward.3} parent=23 // pred_fallthru
        _
    $region24: #{deconv_block_forward.3} parent=5 // pred_fallthru
      _
    %p136 = scmp.le.s32.totalorder 1, %s9
    %p137 = scmp.lt.s32.totalorder %s9, 3
    %p138 = pnand %p136, %p137
    %p139 = pneg %p138
    // Predicated region
    $region29: #{deconv_block_forward.3} parent=5 // pred_check
      _
    $region30: #{deconv_block_forward.3} parent=5 // pred_check_branch
      %141 = sbr.rel (%p138) target = $region32
    $region31: #{deconv_block_forward.3} parent=5 // pred_region
      %s142 = ssub.s32 %s9, 1
      %p143 = scmp.lt.s32.totalorder %s14, 1
      %s144 = scalar_select %p143, %s14, 1
      %s145 = smul.addr %s144, 32
      %s146 = smul.addr %s145, 8
      %s147 = scalar_lea.vmem %s0, %s146
      %p148 = pneg %p35
      %p149 = pneg %p32
      %p150 = pneg %p56
      %p151 = pneg %p53
      %p152 = pneg %p77
      %p153 = pneg %p74
      %p154 = pneg %p103
      %p155 = pneg %p100
      %p156 = scmp.lt.s32.totalorder %s14, 1
      %s157 = scalar_select %p156, %s14, 1
      %s158 = smul.addr %s157, 32
      %s159 = smul.addr %s158, 8
      %s160 = scalar_lea.vmem %s3, %s159
      %p161 = scmp.lt.s32.totalorder %s14, 1
      %s162 = scalar_select %p161, %s14, 1
      %s163 = smul.addr %s162, 32
      %s164 = smul.addr %s163, 8
      %s165 = scalar_lea.vmem %s0, %s164
      %p166 = scmp.lt.s32.totalorder %s14, 1
      %s167 = scalar_select %p166, %s14, 1
      %s168 = smul.addr %s167, 32
      %s169 = smul.addr %s168, 8
      %s170 = scalar_lea.vmem %s3, %s169
      %v171 = vld [vmem:[%s165] sm:$0xff]
      %v172 = vld [vmem:[%s165 + $0x8] sm:$0xff]
      %v173 = vld [vmem:[%s165 + $0x10] sm:$0xff]
      %v174 = vld [vmem:[%s165 + $0x18] sm:$0xff]
      %v175 = vld [vmem:[%s165 + $0x20] sm:$0xff]
      %v176 = vld [vmem:[%s165 + $0x28] sm:$0xff]
      %v177 = vld [vmem:[%s165 + $0x30] sm:$0xff]
      %v178 = vld [vmem:[%s165 + $0x38] sm:$0xff]
      %v179 = vld [vmem:[%s165 + $0x40] sm:$0xff]
      %v180 = vld [vmem:[%s165 + $0x48] sm:$0xff]
      %v181 = vld [vmem:[%s165 + $0x50] sm:$0xff]
      %v182 = vld [vmem:[%s165 + $0x58] sm:$0xff]
      %v183 = vld [vmem:[%s165 + $0x60] sm:$0xff]
      %v184 = vld [vmem:[%s165 + $0x68] sm:$0xff]
      %v185 = vld [vmem:[%s165 + $0x70] sm:$0xff]
      %v186 = vld [vmem:[%s165 + $0x78] sm:$0xff]
      %v187 = vld [vmem:[%s165 + $0x80] sm:$0xff]
      %v188 = vld [vmem:[%s165 + $0x88] sm:$0xff]
      %v189 = vld [vmem:[%s165 + $0x90] sm:$0xff]
      %v190 = vld [vmem:[%s165 + $0x98] sm:$0xff]
      %v191 = vld [vmem:[%s165 + $0xa0] sm:$0xff]
      %v192 = vld [vmem:[%s165 + $0xa8] sm:$0xff]
      %v193 = vld [vmem:[%s165 + $0xb0] sm:$0xff]
      %v194 = vld [vmem:[%s165 + $0xb8] sm:$0xff]
      %v195 = vld [vmem:[%s165 + $0xc0] sm:$0xff]
      %v196 = vld [vmem:[%s165 + $0xc8] sm:$0xff]
      %v197 = vld [vmem:[%s165 + $0xd0] sm:$0xff]
      %v198 = vld [vmem:[%s165 + $0xd8] sm:$0xff]
      %v199 = vld [vmem:[%s165 + $0xe0] sm:$0xff]
      %v200 = vld [vmem:[%s165 + $0xe8] sm:$0xff]
      %v201 = vld [vmem:[%s165 + $0xf0] sm:$0xff]
      %v202 = vld [vmem:[%s165 + $0xf8] sm:$0xff]
      %v203 = vld [vmem:[%s1] sm:$0x1]
      %v205 = vlaneseq
      %v206 = vshrl.u32 %v205, 7
      %v207 = vsub.s32 0, %v206
      %v208 = vrot.slane %v203, %v207
      %v210 = vmul.f32 %v171, %v208
      %v211 = vmul.f32 %v172, %v208
      %v212 = vmul.f32 %v173, %v208
      %v213 = vmul.f32 %v174, %v208
      %v214 = vmul.f32 %v175, %v208
      %v215 = vmul.f32 %v176, %v208
      %v216 = vmul.f32 %v177, %v208
      %v217 = vmul.f32 %v178, %v208
      %v218 = vmul.f32 %v179, %v208
      %v219 = vmul.f32 %v180, %v208
      %v220 = vmul.f32 %v181, %v208
      %v221 = vmul.f32 %v182, %v208
      %v222 = vmul.f32 %v183, %v208
      %v223 = vmul.f32 %v184, %v208
      %v224 = vmul.f32 %v185, %v208
      %v225 = vmul.f32 %v186, %v208
      %v226 = vmul.f32 %v187, %v208
      %v227 = vmul.f32 %v188, %v208
      %v228 = vmul.f32 %v189, %v208
      %v229 = vmul.f32 %v190, %v208
      %v230 = vmul.f32 %v191, %v208
      %v231 = vmul.f32 %v192, %v208
      %v232 = vmul.f32 %v193, %v208
      %v233 = vmul.f32 %v194, %v208
      %v234 = vmul.f32 %v195, %v208
      %v235 = vmul.f32 %v196, %v208
      %v236 = vmul.f32 %v197, %v208
      %v237 = vmul.f32 %v198, %v208
      %v238 = vmul.f32 %v199, %v208
      %v239 = vmul.f32 %v200, %v208
      %v240 = vmul.f32 %v201, %v208
      %v241 = vmul.f32 %v202, %v208
      %v242 = vld [vmem:[%s2] sm:$0x1]
      %v244 = vlaneseq
      %v245 = vshrl.u32 %v244, 7
      %v246 = vsub.s32 0, %v245
      %v247 = vrot.slane %v242, %v246
      %v249 = vadd.f32 %v210, %v247
      %v250 = vadd.f32 %v211, %v247
      %v251 = vadd.f32 %v212, %v247
      %v252 = vadd.f32 %v213, %v247
      %v253 = vadd.f32 %v214, %v247
      %v254 = vadd.f32 %v215, %v247
      %v255 = vadd.f32 %v216, %v247
      %v256 = vadd.f32 %v217, %v247
      %v257 = vadd.f32 %v218, %v247
      %v258 = vadd.f32 %v219, %v247
      %v259 = vadd.f32 %v220, %v247
      %v260 = vadd.f32 %v221, %v247
      %v261 = vadd.f32 %v222, %v247
      %v262 = vadd.f32 %v223, %v247
      %v263 = vadd.f32 %v224, %v247
      %v264 = vadd.f32 %v225, %v247
      %v265 = vadd.f32 %v226, %v247
      %v266 = vadd.f32 %v227, %v247
      %v267 = vadd.f32 %v228, %v247
      %v268 = vadd.f32 %v229, %v247
      %v269 = vadd.f32 %v230, %v247
      %v270 = vadd.f32 %v231, %v247
      %v271 = vadd.f32 %v232, %v247
      %v272 = vadd.f32 %v233, %v247
      %v273 = vadd.f32 %v234, %v247
      %v274 = vadd.f32 %v235, %v247
      %v275 = vadd.f32 %v236, %v247
      %v276 = vadd.f32 %v237, %v247
      %v277 = vadd.f32 %v238, %v247
      %v278 = vadd.f32 %v239, %v247
      %v279 = vadd.f32 %v240, %v247
      %v280 = vadd.f32 %v241, %v247
      %281 = vst [vmem:[%s170] sm:$0xff] %v249
      %282 = vst [vmem:[%s170 + $0x8] sm:$0xff] %v250
      %283 = vst [vmem:[%s170 + $0x10] sm:$0xff] %v251
      %284 = vst [vmem:[%s170 + $0x18] sm:$0xff] %v252
      %285 = vst [vmem:[%s170 + $0x20] sm:$0xff] %v253
      %286 = vst [vmem:[%s170 + $0x28] sm:$0xff] %v254
      %287 = vst [vmem:[%s170 + $0x30] sm:$0xff] %v255
      %288 = vst [vmem:[%s170 + $0x38] sm:$0xff] %v256
      %289 = vst [vmem:[%s170 + $0x40] sm:$0xff] %v257
      %290 = vst [vmem:[%s170 + $0x48] sm:$0xff] %v258
      %291 = vst [vmem:[%s170 + $0x50] sm:$0xff] %v259
      %292 = vst [vmem:[%s170 + $0x58] sm:$0xff] %v260
      %293 = vst [vmem:[%s170 + $0x60] sm:$0xff] %v261
      %294 = vst [vmem:[%s170 + $0x68] sm:$0xff] %v262
      %295 = vst [vmem:[%s170 + $0x70] sm:$0xff] %v263
      %296 = vst [vmem:[%s170 + $0x78] sm:$0xff] %v264
      %297 = vst [vmem:[%s170 + $0x80] sm:$0xff] %v265
      %298 = vst [vmem:[%s170 + $0x88] sm:$0xff] %v266
      %299 = vst [vmem:[%s170 + $0x90] sm:$0xff] %v267
      %300 = vst [vmem:[%s170 + $0x98] sm:$0xff] %v268
      %301 = vst [vmem:[%s170 + $0xa0] sm:$0xff] %v269
      %302 = vst [vmem:[%s170 + $0xa8] sm:$0xff] %v270
      %303 = vst [vmem:[%s170 + $0xb0] sm:$0xff] %v271
      %304 = vst [vmem:[%s170 + $0xb8] sm:$0xff] %v272
      %305 = vst [vmem:[%s170 + $0xc0] sm:$0xff] %v273
      %306 = vst [vmem:[%s170 + $0xc8] sm:$0xff] %v274
      %307 = vst [vmem:[%s170 + $0xd0] sm:$0xff] %v275
      %308 = vst [vmem:[%s170 + $0xd8] sm:$0xff] %v276
      %309 = vst [vmem:[%s170 + $0xe0] sm:$0xff] %v277
      %310 = vst [vmem:[%s170 + $0xe8] sm:$0xff] %v278
      %311 = vst [vmem:[%s170 + $0xf0] sm:$0xff] %v279
      %312 = vst [vmem:[%s170 + $0xf8] sm:$0xff] %v280
      %p313 = scmp.lt.s32.totalorder %s14, 1
      %s314 = scalar_select %p313, %s14, 1
      %s315 = smul.addr %s314, 32
      %s316 = smul.addr %s315, 8
      %s317 = scalar_lea.vmem %s3, %s316
      // Predicated region
      $region33: #{deconv_block_forward.3} parent=31 // pred_check
        %p318 = pneg %p100
      $region34: #{deconv_block_forward.3} parent=31 // pred_check_branch
        %320 = sbr.rel (%p318) target = $region36
      $region35: #{deconv_block_forward.3} parent=31 // pred_region
        _
      $region36: #{deconv_block_forward.3} parent=31 // pred_fallthru
        _
    $region32: #{deconv_block_forward.3} parent=5 // pred_fallthru
      _
    %p321 = scmp.le.s32.totalorder 2, %s9
    // Predicated region
    $region37: #{deconv_block_forward.3} parent=5 // pred_check
      %p322 = pneg %p321
    $region38: #{deconv_block_forward.3} parent=5 // pred_check_branch
      %324 = sbr.rel (%p322) target = $region40
    $region39: #{deconv_block_forward.3} parent=5 // pred_region
      %s325 = ssub.s32 %s9, 2
      // Predicated region
      $region41: #{deconv_block_forward.3} parent=39 // pred_check
        %p326 = pneg %p106
      $region42: #{deconv_block_forward.3} parent=39 // pred_check_branch
        %328 = sbr.rel (%p326) target = $region44
      $region43: #{deconv_block_forward.3} parent=39 // pred_region
        %p329 = scmp.lt.s32.totalorder %s15, 1
        %s330 = scalar_select %p329, %s15, 1
        %s331 = smul.addr %s330, 32
        %s332 = smul.addr %s331, 8
        %s333 = scalar_lea.vmem %s3, %s332
      $region44: #{deconv_block_forward.3} parent=39 // pred_fallthru
        _
    $region40: #{deconv_block_forward.3} parent=5 // pred_fallthru
      _
  $region6: #{deconv_block_forward.3} parent=0 // loop_footer
    %s13 = sadd.s32 1, %s9
  $region7: #{deconv_block_forward.3} parent=0 // loop_footer_branch
    %8 = sbr.rel target = $region3
  $region8: #{deconv_block_forward.3} parent=0 // loop_exit
    _

// kernel: deconv_block_forward.2
$region0: #{deconv_block_forward.2}
  #allocation0 [shape = 'u32[]', space=smem, size = 0x4, offset = 0x4, fixed_abs, tag = 'smem constant byte address 0x4 - core index']
  #allocation1 [shape = 'u32[144,128]{1,0:T(1,128)}', space=vmem, size = 0x12000, scoped, tag = 'internal scratch']
  #allocation2 [shape = 'f32[18,18,8]{2,1,0:T(8,128)}', space=vmem, size = 0x36000, scoped, tag = 'scratch operand']
  %s0 = inlined_call_operand.vmem [shape: f32[2,16,16,8], index: 0, kind: input, shape index: {}]
  %s1 = inlined_call_operand.vmem [shape: f32[72,128], index: 1, kind: input, shape index: {}]
  %s2 = inlined_call_operand.vmem [shape: f32[1,128], index: 2, kind: input, shape index: {}]
  %s3 = inlined_call_operand.vmem [shape: f32[2,256,128], index: 3, kind: output, shape index: {0}]
  %s4 = inlined_call_operand.vmem [shape: f32[2,128], index: 4, kind: output, shape index: {1}]
  %5 = xla_tuple %s3, %s4
  %s6 = sld [smem:[#allocation0]]
  $region57: #{deconv_block_forward.2} parent=0
    _
  %s8 = ssub.s32 1, %s6
  %s9 = scalar_select 0, %s8, %s6
  loop: start=0, step=1, limit=4
  $region2: #{deconv_block_forward.2} parent=0 // loop_pre_header
    _
  $region3: #{deconv_block_forward.2} parent=0 // loop_header
    %s11 = sphi 0, %s15
    %p12 = scmp.ge.s32.totalorder %s11, 4
    %s21 = sphi 0, %s23
    %s24 = sphi 0, %s21
    %s25 = sphi 0, %s24
    %s41 = sphi 0, %s25
    %s45 = sphi 0, %s45
    %s47 = sphi 0, %s45
    %s48 = sphi 0, %s47
    %s62 = sphi 0, %s48
    %s66 = sphi 0, %s66
    %s68 = sphi 0, %s66
    %s69 = sphi 0, %s68
    %s83 = sphi 0, %s69
    %s89 = sphi 0, %s91
    %s92 = sphi 0, %s89
    %s93 = sphi 0, %s92
    %s109 = sphi 0, %s93
    %s113 = sphi 0, %s113
    %s115 = sphi 0, %s113
    %s116 = sphi 0, %s115
    %s130 = sphi 0, %s116
  $region4: #{deconv_block_forward.2} parent=0 // loop_header_branch
    %14 = sbr.rel (%p12) target = $region8
  $region5: #{deconv_block_forward.2} parent=0 // loop_body
    %s16 = ssub.s32 %s11, 1
    %s17 = ssub.s32 %s11, 2
    %s18 = sadd.s32 %s11, 1
    %s19 = ssub.s32 %s11, %s18
    %p20 = scmp.eq.s32.totalorder %s19, 0
    %s22 = sadd.s32 %s21, 1
    %s23 = scalar_select %p20, %s21, %s22
    %p26 = pneg %p20
    %p27 = scmp.eq.s32.totalorder %s11, 1
    %p28 = por %p26, %p27
    %p29 = scmp.ne.s32.totalorder %s21, %s24
    %p30 = scmp.eq.s32.totalorder %s11, 0
    %p31 = por %p29, %p30
    %p32 = scmp.ne.s32.totalorder %s21, %s24
    %p33 = scmp.eq.s32.totalorder %s16, 1
    %p34 = por %p32, %p33
    %p35 = scmp.ne.s32.totalorder %s24, %s25
    %p36 = scmp.eq.s32.totalorder %s16, 0
    %p37 = por %p35, %p36
    %p38 = scmp.ne.s32.totalorder %s24, %s25
    %p39 = scmp.eq.s32.totalorder %s17, 1
    %p40 = por %p38, %p39
    %p42 = scmp.ne.s32.totalorder %s25, %s41
    %p43 = scmp.eq.s32.totalorder %s17, 0
    %p44 = por %p42, %p43
    %s46 = sadd.s32 %s45, 1
    %p49 = scmp.eq.s32.totalorder %s11, 1
    %p50 = scmp.ne.s32.totalorder %s45, %s47
    %p51 = scmp.eq.s32.totalorder %s11, 0
    %p52 = por %p50, %p51
    %p53 = scmp.ne.s32.totalorder %s45, %s47
    %p54 = scmp.eq.s32.totalorder %s16, 1
    %p55 = por %p53, %p54
    %p56 = scmp.ne.s32.totalorder %s47, %s48
    %p57 = scmp.eq.s32.totalorder %s16, 0
    %p58 = por %p56, %p57
    %p59 = scmp.ne.s32.totalorder %s47, %s48
    %p60 = scmp.eq.s32.totalorder %s17, 1
    %p61 = por %p59, %p60
    %p63 = scmp.ne.s32.totalorder %s48, %s62
    %p64 = scmp.eq.s32.totalorder %s17, 0
    %p65 = por %p63, %p64
    %s67 = sadd.s32 %s66, 1
    %p70 = scmp.eq.s32.totalorder %s11, 1
    %p71 = scmp.ne.s32.totalorder %s66, %s68
    %p72 = scmp.eq.s32.totalorder %s11, 0
    %p73 = por %p71, %p72
    %p74 = scmp.ne.s32.totalorder %s66, %s68
    %p75 = scmp.eq.s32.totalorder %s16, 1
    %p76 = por %p74, %p75
    %p77 = scmp.ne.s32.totalorder %s68, %s69
    %p78 = scmp.eq.s32.totalorder %s16, 0
    %p79 = por %p77, %p78
    %p80 = scmp.ne.s32.totalorder %s68, %s69
    %p81 = scmp.eq.s32.totalorder %s17, 1
    %p82 = por %p80, %p81
    %p84 = scmp.ne.s32.totalorder %s69, %s83
    %p85 = scmp.eq.s32.totalorder %s17, 0
    %p86 = por %p84, %p85
    %s87 = ssub.s32 %s11, %s18
    %p88 = scmp.eq.s32.totalorder %s87, 0
    %s90 = sadd.s32 %s89, 1
    %s91 = scalar_select %p88, %s89, %s90
    %p94 = pneg %p88
    %p95 = scmp.eq.s32.totalorder %s11, 1
    %p96 = por %p94, %p95
    %p97 = scmp.ne.s32.totalorder %s89, %s92
    %p98 = scmp.eq.s32.totalorder %s11, 0
    %p99 = por %p97, %p98
    %p100 = scmp.ne.s32.totalorder %s89, %s92
    %p101 = scmp.eq.s32.totalorder %s16, 1
    %p102 = por %p100, %p101
    %p103 = scmp.ne.s32.totalorder %s92, %s93
    %p104 = scmp.eq.s32.totalorder %s16, 0
    %p105 = por %p103, %p104
    %p106 = scmp.ne.s32.totalorder %s92, %s93
    %p107 = scmp.eq.s32.totalorder %s17, 1
    %p108 = por %p106, %p107
    %p110 = scmp.ne.s32.totalorder %s93, %s109
    %p111 = scmp.eq.s32.totalorder %s17, 0
    %p112 = por %p110, %p111
    %s114 = sadd.s32 %s113, 1
    %p117 = scmp.eq.s32.totalorder %s11, 1
    %p118 = scmp.ne.s32.totalorder %s113, %s115
    %p119 = scmp.eq.s32.totalorder %s11, 0
    %p120 = por %p118, %p119
    %p121 = scmp.ne.s32.totalorder %s113, %s115
    %p122 = scmp.eq.s32.totalorder %s16, 1
    %p123 = por %p121, %p122
    %p124 = scmp.ne.s32.totalorder %s115, %s116
    %p125 = scmp.eq.s32.totalorder %s16, 0
    %p126 = por %p124, %p125
    %p127 = scmp.ne.s32.totalorder %s115, %s116
    %p128 = scmp.eq.s32.totalorder %s17, 1
    %p129 = por %p127, %p128
    %p131 = scmp.ne.s32.totalorder %s116, %s130
    %p132 = scmp.eq.s32.totalorder %s17, 0
    %p133 = por %p131, %p132
    %p134 = scmp.le.s32.totalorder 1, %s11
    %p135 = scmp.lt.s32.totalorder %s11, 3
    %p136 = pnand %p134, %p135
    %p137 = pneg %p136
    // Predicated region
    $region9: #{deconv_block_forward.2} parent=5 // pred_check
      _
    $region10: #{deconv_block_forward.2} parent=5 // pred_check_branch
      %139 = sbr.rel (%p136) target = $region12
    $region11: #{deconv_block_forward.2} parent=5 // pred_region
      %s140 = ssub.s32 %s11, 1
      // Predicated region
      $region13: #{deconv_block_forward.2} parent=11 // pred_check
        %p141 = pneg %p58
      $region14: #{deconv_block_forward.2} parent=11 // pred_check_branch
        %143 = sbr.rel (%p141) target = $region16
      $region15: #{deconv_block_forward.2} parent=11 // pred_region
        _
      $region16: #{deconv_block_forward.2} parent=11 // pred_fallthru
        _
      // Predicated region
      $region17: #{deconv_block_forward.2} parent=11 // pred_check
        %p144 = pneg %p79
      $region18: #{deconv_block_forward.2} parent=11 // pred_check_branch
        %146 = sbr.rel (%p144) target = $region20
      $region19: #{deconv_block_forward.2} parent=11 // pred_region
        _
      $region20: #{deconv_block_forward.2} parent=11 // pred_fallthru
        _
    $region12: #{deconv_block_forward.2} parent=5 // pred_fallthru
      _
    %p147 = scmp.lt.s32.totalorder %s11, 2
    // Predicated region
    $region21: #{deconv_block_forward.2} parent=5 // pred_check
      %p148 = pneg %p147
    $region22: #{deconv_block_forward.2} parent=5 // pred_check_branch
      %150 = sbr.rel (%p148) target = $region24
    $region23: #{deconv_block_forward.2} parent=5 // pred_region
      // Predicated region
      $region25: #{deconv_block_forward.2} parent=23 // pred_check
        %p151 = pneg %p31
      $region26: #{deconv_block_forward.2} parent=23 // pred_check_branch
        %153 = sbr.rel (%p151) target = $region28
      $region27: #{deconv_block_forward.2} parent=23 // pred_region
        %p154 = scmp.lt.s32.totalorder %s11, 1
        %s155 = scalar_select %p154, %s11, 1
        %s156 = smul.addr %s155, 32
        %s157 = smul.addr %s156, 8
        %s158 = scalar_lea.vmem %s0, %s157
      $region28: #{deconv_block_forward.2} parent=23 // pred_fallthru
        _
    $region24: #{deconv_block_forward.2} parent=5 // pred_fallthru
      _
    %p159 = scmp.le.s32.totalorder 1, %s11
    %p160 = scmp.lt.s32.totalorder %s11, 3
    %p161 = pnand %p159, %p160
    %p162 = pneg %p161
    // Predicated region
    $region29: #{deconv_block_forward.2} parent=5 // pred_check
      _
    $region30: #{deconv_block_forward.2} parent=5 // pred_check_branch
      %164 = sbr.rel (%p161) target = $region32
    $region31: #{deconv_block_forward.2} parent=5 // pred_region
      %s165 = ssub.s32 %s11, 1
      %p166 = scmp.lt.s32.totalorder %s16, 1
      %s167 = scalar_select %p166, %s16, 1
      %s168 = smul.addr %s167, 32
      %s169 = smul.addr %s168, 8
      %s170 = scalar_lea.vmem %s0, %s169
      %p171 = pneg %p37
      %p172 = pneg %p34
      %p173 = pneg %p58
      %p174 = pneg %p55
      %p175 = pneg %p79
      %p176 = pneg %p76
      %p177 = pneg %p105
      %p178 = pneg %p102
      %p179 = scmp.lt.s32.totalorder %s16, 1
      %s180 = scalar_select %p179, %s16, 1
      %s181 = smul.addr %s180, 32
      %s182 = smul.addr %s181, 8
      %s183 = scalar_lea.vmem %s3, %s182
      %p184 = pneg %p126
      %p185 = pneg %p123
      %p186 = scmp.lt.s32.totalorder %s16, 1
      %s187 = scalar_select %p186, %s16, 1
      %s188 = smul.addr %s187, 32
      %s189 = smul.addr %s188, 8
      %s190 = scalar_lea.vmem %s0, %s189
      %p191 = scmp.lt.s32.totalorder %s16, 1
      %s192 = scalar_select %p191, %s16, 1
      %s193 = smul.addr %s192, 32
      %s194 = smul.addr %s193, 8
      %s195 = scalar_lea.vmem %s3, %s194
      %p196 = scmp.eq.s32.totalorder %s16, 0
      // Predicated region
      $region33: #{deconv_block_forward.2} parent=31 // pred_check
        %p197 = pneg %p196
      $region34: #{deconv_block_forward.2} parent=31 // pred_check_branch
        %199 = sbr.rel (%p197) target = $region36
      $region35: #{deconv_block_forward.2} parent=31 // pred_region
        %vm200 = vcmask 64512
        %201 = vst.msk [vmem:[#allocation2] sm:$0xff] %vm200, 0.0
        %202 = vst.msk [vmem:[#allocation2 + $0x8] sm:$0xff] %vm200, 0.0
        %vm203 = vcmask 58368
        %204 = vst.msk [vmem:[#allocation2 + $0x10] sm:$0x3] %vm203, 0.0
        %205 = vst.msk [vmem:[#allocation2 + $0x18] sm:$0xff] %vm200, 0.0
        %206 = vst.msk [vmem:[#allocation2 + $0x20] sm:$0xff] %vm200, 0.0
        %207 = vst.msk [vmem:[#allocation2 + $0x28] sm:$0x3] %vm203, 0.0
        %208 = vst.msk [vmem:[#allocation2 + $0x30] sm:$0xff] %vm200, 0.0
        %209 = vst.msk [vmem:[#allocation2 + $0x38] sm:$0xff] %vm200, 0.0
        %210 = vst.msk [vmem:[#allocation2 + $0x40] sm:$0x3] %vm203, 0.0
        %211 = vst.msk [vmem:[#allocation2 + $0x48] sm:$0xff] %vm200, 0.0
        %212 = vst.msk [vmem:[#allocation2 + $0x50] sm:$0xff] %vm200, 0.0
        %213 = vst.msk [vmem:[#allocation2 + $0x58] sm:$0x3] %vm203, 0.0
        %214 = vst.msk [vmem:[#allocation2 + $0x60] sm:$0xff] %vm200, 0.0
        %215 = vst.msk [vmem:[#allocation2 + $0x68] sm:$0xff] %vm200, 0.0
        %216 = vst.msk [vmem:[#allocation2 + $0x70] sm:$0x3] %vm203, 0.0
        %217 = vst.msk [vmem:[#allocation2 + $0x78] sm:$0xff] %vm200, 0.0
        %218 = vst.msk [vmem:[#allocation2 + $0x80] sm:$0xff] %vm200, 0.0
        %219 = vst.msk [vmem:[#allocation2 + $0x88] sm:$0x3] %vm203, 0.0
        %220 = vst.msk [vmem:[#allocation2 + $0x90] sm:$0xff] %vm200, 0.0
        %221 = vst.msk [vmem:[#allocation2 + $0x98] sm:$0xff] %vm200, 0.0
        %222 = vst.msk [vmem:[#allocation2 + $0xa0] sm:$0x3] %vm203, 0.0
        %223 = vst.msk [vmem:[#allocation2 + $0xa8] sm:$0xff] %vm200, 0.0
        %224 = vst.msk [vmem:[#allocation2 + $0xb0] sm:$0xff] %vm200, 0.0
        %225 = vst.msk [vmem:[#allocation2 + $0xb8] sm:$0x3] %vm203, 0.0
        %226 = vst.msk [vmem:[#allocation2 + $0xc0] sm:$0xff] %vm200, 0.0
        %227 = vst.msk [vmem:[#allocation2 + $0xc8] sm:$0xff] %vm200, 0.0
        %228 = vst.msk [vmem:[#allocation2 + $0xd0] sm:$0x3] %vm203, 0.0
        %229 = vst.msk [vmem:[#allocation2 + $0xd8] sm:$0xff] %vm200, 0.0
        %230 = vst.msk [vmem:[#allocation2 + $0xe0] sm:$0xff] %vm200, 0.0
        %231 = vst.msk [vmem:[#allocation2 + $0xe8] sm:$0x3] %vm203, 0.0
        %232 = vst.msk [vmem:[#allocation2 + $0xf0] sm:$0xff] %vm200, 0.0
        %233 = vst.msk [vmem:[#allocation2 + $0xf8] sm:$0xff] %vm200, 0.0
        %234 = vst.msk [vmem:[#allocation2 + $0x100] sm:$0x3] %vm203, 0.0
        %235 = vst.msk [vmem:[#allocation2 + $0x108] sm:$0xff] %vm200, 0.0
        %236 = vst.msk [vmem:[#allocation2 + $0x110] sm:$0xff] %vm200, 0.0
        %237 = vst.msk [vmem:[#allocation2 + $0x118] sm:$0x3] %vm203, 0.0
        %238 = vst.msk [vmem:[#allocation2 + $0x120] sm:$0xff] %vm200, 0.0
        %239 = vst.msk [vmem:[#allocation2 + $0x128] sm:$0xff] %vm200, 0.0
        %240 = vst.msk [vmem:[#allocation2 + $0x130] sm:$0x3] %vm203, 0.0
        %241 = vst.msk [vmem:[#allocation2 + $0x138] sm:$0xff] %vm200, 0.0
        %242 = vst.msk [vmem:[#allocation2 + $0x140] sm:$0xff] %vm200, 0.0
        %243 = vst.msk [vmem:[#allocation2 + $0x148] sm:$0x3] %vm203, 0.0
        %244 = vst.msk [vmem:[#allocation2 + $0x150] sm:$0xff] %vm200, 0.0
        %245 = vst.msk [vmem:[#allocation2 + $0x158] sm:$0xff] %vm200, 0.0
        %246 = vst.msk [vmem:[#allocation2 + $0x160] sm:$0x3] %vm203, 0.0
        %247 = vst.msk [vmem:[#allocation2 + $0x168] sm:$0xff] %vm200, 0.0
        %248 = vst.msk [vmem:[#allocation2 + $0x170] sm:$0xff] %vm200, 0.0
        %249 = vst.msk [vmem:[#allocation2 + $0x178] sm:$0x3] %vm203, 0.0
        %250 = vst.msk [vmem:[#allocation2 + $0x180] sm:$0xff] %vm200, 0.0
        %251 = vst.msk [vmem:[#allocation2 + $0x188] sm:$0xff] %vm200, 0.0
        %252 = vst.msk [vmem:[#allocation2 + $0x190] sm:$0x3] %vm203, 0.0
        %253 = vst.msk [vmem:[#allocation2 + $0x198] sm:$0xff] %vm200, 0.0
        %254 = vst.msk [vmem:[#allocation2 + $0x1a0] sm:$0xff] %vm200, 0.0
        %255 = vst.msk [vmem:[#allocation2 + $0x1a8] sm:$0x3] %vm203, 0.0
        %256 = vst [vmem:[%s4] sm:$0x3] 0.0
      $region36: #{deconv_block_forward.2} parent=31 // pred_fallthru
        _
      %v257 = vld [vmem:[%s190] sm:$0xff]
      %v258 = vld [vmem:[%s190 + $0x8] sm:$0xff]
      %v259 = vld [vmem:[%s190 + $0x10] sm:$0xff]
      %v260 = vld [vmem:[%s190 + $0x18] sm:$0xff]
      %v261 = vld [vmem:[%s190 + $0x20] sm:$0xff]
      %v262 = vld [vmem:[%s190 + $0x28] sm:$0xff]
      %v263 = vld [vmem:[%s190 + $0x30] sm:$0xff]
      %v264 = vld [vmem:[%s190 + $0x38] sm:$0xff]
      %v265 = vld [vmem:[%s190 + $0x40] sm:$0xff]
      %v266 = vld [vmem:[%s190 + $0x48] sm:$0xff]
      %v267 = vld [vmem:[%s190 + $0x50] sm:$0xff]
      %v268 = vld [vmem:[%s190 + $0x58] sm:$0xff]
      %v269 = vld [vmem:[%s190 + $0x60] sm:$0xff]
      %v270 = vld [vmem:[%s190 + $0x68] sm:$0xff]
      %v271 = vld [vmem:[%s190 + $0x70] sm:$0xff]
      %v272 = vld [vmem:[%s190 + $0x78] sm:$0xff]
      %v273 = vld [vmem:[%s190 + $0x80] sm:$0xff]
      %v274 = vld [vmem:[%s190 + $0x88] sm:$0xff]
      %v275 = vld [vmem:[%s190 + $0x90] sm:$0xff]
      %v276 = vld [vmem:[%s190 + $0x98] sm:$0xff]
      %v277 = vld [vmem:[%s190 + $0xa0] sm:$0xff]
      %v278 = vld [vmem:[%s190 + $0xa8] sm:$0xff]
      %v279 = vld [vmem:[%s190 + $0xb0] sm:$0xff]
      %v280 = vld [vmem:[%s190 + $0xb8] sm:$0xff]
      %v281 = vld [vmem:[%s190 + $0xc0] sm:$0xff]
      %v282 = vld [vmem:[%s190 + $0xc8] sm:$0xff]
      %v283 = vld [vmem:[%s190 + $0xd0] sm:$0xff]
      %v284 = vld [vmem:[%s190 + $0xd8] sm:$0xff]
      %v285 = vld [vmem:[%s190 + $0xe0] sm:$0xff]
      %v286 = vld [vmem:[%s190 + $0xe8] sm:$0xff]
      %v287 = vld [vmem:[%s190 + $0xf0] sm:$0xff]
      %v288 = vld [vmem:[%s190 + $0xf8] sm:$0xff]
      %v289 = vmax.f32 %v257, 0.0
      %v290 = vmax.f32 %v258, 0.0
      %v291 = vmax.f32 %v259, 0.0
      %v292 = vmax.f32 %v260, 0.0
      %v293 = vmax.f32 %v261, 0.0
      %v294 = vmax.f32 %v262, 0.0
      %v295 = vmax.f32 %v263, 0.0
      %v296 = vmax.f32 %v264, 0.0
      %v297 = vmax.f32 %v265, 0.0
      %v298 = vmax.f32 %v266, 0.0
      %v299 = vmax.f32 %v267, 0.0
      %v300 = vmax.f32 %v268, 0.0
      %v301 = vmax.f32 %v269, 0.0
      %v302 = vmax.f32 %v270, 0.0
      %v303 = vmax.f32 %v271, 0.0
      %v304 = vmax.f32 %v272, 0.0
      %v305 = vmax.f32 %v273, 0.0
      %v306 = vmax.f32 %v274, 0.0
      %v307 = vmax.f32 %v275, 0.0
      %v308 = vmax.f32 %v276, 0.0
      %v309 = vmax.f32 %v277, 0.0
      %v310 = vmax.f32 %v278, 0.0
      %v311 = vmax.f32 %v279, 0.0
      %v312 = vmax.f32 %v280, 0.0
      %v313 = vmax.f32 %v281, 0.0
      %v314 = vmax.f32 %v282, 0.0
      %v315 = vmax.f32 %v283, 0.0
      %v316 = vmax.f32 %v284, 0.0
      %v317 = vmax.f32 %v285, 0.0
      %v318 = vmax.f32 %v286, 0.0
      %v319 = vmax.f32 %v287, 0.0
      %v320 = vmax.f32 %v288, 0.0
      %s321 = scalar_lea.vmem [#allocation2], 24
      %vm322 = vcmask 64512
      %323 = vst.msk [vmem:[%s321 + $0x1] sm:$0xff] %vm322, %v289
      %324 = vst.msk [vmem:[%s321 + $0x9] sm:$0xff] %vm322, %v290
      %325 = vst.msk [vmem:[%s321 + $0x19] sm:$0xff] %vm322, %v291
      %326 = vst.msk [vmem:[%s321 + $0x21] sm:$0xff] %vm322, %v292
      %327 = vst.msk [vmem:[%s321 + $0x31] sm:$0xff] %vm322, %v293
      %328 = vst.msk [vmem:[%s321 + $0x39] sm:$0xff] %vm322, %v294
      %329 = vst.msk [vmem:[%s321 + $0x49] sm:$0xff] %vm322, %v295
      %330 = vst.msk [vmem:[%s321 + $0x51] sm:$0xff] %vm322, %v296
      %331 = vst.msk [vmem:[%s321 + $0x61] sm:$0xff] %vm322, %v297
      %332 = vst.msk [vmem:[%s321 + $0x69] sm:$0xff] %vm322, %v298
      %333 = vst.msk [vmem:[%s321 + $0x79] sm:$0xff] %vm322, %v299
      %334 = vst.msk [vmem:[%s321 + $0x81] sm:$0xff] %vm322, %v300
      %335 = vst.msk [vmem:[%s321 + $0x91] sm:$0xff] %vm322, %v301
      %336 = vst.msk [vmem:[%s321 + $0x99] sm:$0xff] %vm322, %v302
      %337 = vst.msk [vmem:[%s321 + $0xa9] sm:$0xff] %vm322, %v303
      %338 = vst.msk [vmem:[%s321 + $0xb1] sm:$0xff] %vm322, %v304
      %339 = vst.msk [vmem:[%s321 + $0xc1] sm:$0xff] %vm322, %v305
      %340 = vst.msk [vmem:[%s321 + $0xc9] sm:$0xff] %vm322, %v306
      %341 = vst.msk [vmem:[%s321 + $0xd9] sm:$0xff] %vm322, %v307
      %342 = vst.msk [vmem:[%s321 + $0xe1] sm:$0xff] %vm322, %v308
      %343 = vst.msk [vmem:[%s321 + $0xf1] sm:$0xff] %vm322, %v309
      %344 = vst.msk [vmem:[%s321 + $0xf9] sm:$0xff] %vm322, %v310
      %345 = vst.msk [vmem:[%s321 + $0x109] sm:$0xff] %vm322, %v311
      %346 = vst.msk [vmem:[%s321 + $0x111] sm:$0xff] %vm322, %v312
      %347 = vst.msk [vmem:[%s321 + $0x121] sm:$0xff] %vm322, %v313
      %348 = vst.msk [vmem:[%s321 + $0x129] sm:$0xff] %vm322, %v314
      %349 = vst.msk [vmem:[%s321 + $0x139] sm:$0xff] %vm322, %v315
      %350 = vst.msk [vmem:[%s321 + $0x141] sm:$0xff] %vm322, %v316
      %351 = vst.msk [vmem:[%s321 + $0x151] sm:$0xff] %vm322, %v317
      %352 = vst.msk [vmem:[%s321 + $0x159] sm:$0xff] %vm322, %v318
      %353 = vst.msk [vmem:[%s321 + $0x169] sm:$0xff] %vm322, %v319
      %354 = vst.msk [vmem:[%s321 + $0x171] sm:$0xff] %vm322, %v320
      %v355 = vld [vmem:[#allocation2] sm:$0xff]
      %v356 = vld [vmem:[#allocation2 + $0x8] sm:$0xff]
      %v357 = vld [vmem:[#allocation2 + $0x18] sm:$0xff]
      %v358 = vld [vmem:[#allocation2 + $0x20] sm:$0xff]
      %v359 = vld [vmem:[#allocation2 + $0x30] sm:$0xff]
      %v360 = vld [vmem:[#allocation2 + $0x38] sm:$0xff]
      %v361 = vld [vmem:[#allocation2 + $0x48] sm:$0xff]
      %v362 = vld [vmem:[#allocation2 + $0x50] sm:$0xff]
      %v363 = vld [vmem:[#allocation2 + $0x60] sm:$0xff]
      %v364 = vld [vmem:[#allocation2 + $0x68] sm:$0xff]
      %v365 = vld [vmem:[#allocation2 + $0x78] sm:$0xff]
      %v366 = vld [vmem:[#allocation2 + $0x80] sm:$0xff]
      %v367 = vld [vmem:[#allocation2 + $0x90] sm:$0xff]
      %v368 = vld [vmem:[#allocation2 + $0x98] sm:$0xff]
      %v369 = vld [vmem:[#allocation2 + $0xa8] sm:$0xff]
      %v370 = vld [vmem:[#allocation2 + $0xb0] sm:$0xff]
      %v371 = vld [vmem:[#allocation2 + $0xc0] sm:$0xff]
      %v372 = vld [vmem:[#allocation2 + $0xc8] sm:$0xff]
      %v373 = vld [vmem:[#allocation2 + $0xd8] sm:$0xff]
      %v374 = vld [vmem:[#allocation2 + $0xe0] sm:$0xff]
      %v375 = vld [vmem:[#allocation2 + $0xf0] sm:$0xff]
      %v376 = vld [vmem:[#allocation2 + $0xf8] sm:$0xff]
      %v377 = vld [vmem:[#allocation2 + $0x108] sm:$0xff]
      %v378 = vld [vmem:[#allocation2 + $0x110] sm:$0xff]
      %v379 = vld [vmem:[#allocation2 + $0x120] sm:$0xff]
      %v380 = vld [vmem:[#allocation2 + $0x128] sm:$0xff]
      %v381 = vld [vmem:[#allocation2 + $0x138] sm:$0xff]
      %v382 = vld [vmem:[#allocation2 + $0x140] sm:$0xff]
      %v383 = vld [vmem:[#allocation2 + $0x150] sm:$0xff]
      %v384 = vld [vmem:[#allocation2 + $0x158] sm:$0xff]
      %v385 = vld [vmem:[#allocation2 + $0x168] sm:$0xff]
      %v386 = vld [vmem:[#allocation2 + $0x170] sm:$0xff]
      %v387 = vld [vmem:[#allocation2 + $0x1] sm:$0xff]
      %v388 = vld [vmem:[#allocation2 + $0x9] sm:$0xff]
      %v389 = vld [vmem:[#allocation2 + $0x19] sm:$0xff]
      %v390 = vld [vmem:[#allocation2 + $0x21] sm:$0xff]
      %v391 = vld [vmem:[#allocation2 + $0x31] sm:$0xff]
      %v392 = vld [vmem:[#allocation2 + $0x39] sm:$0xff]
      %v393 = vld [vmem:[#allocation2 + $0x49] sm:$0xff]
      %v394 = vld [vmem:[#allocation2 + $0x51] sm:$0xff]
      %v395 = vld [vmem:[#allocation2 + $0x61] sm:$0xff]
      %v396 = vld [vmem:[#allocation2 + $0x69] sm:$0xff]
      %v397 = vld [vmem:[#allocation2 + $0x79] sm:$0xff]
      %v398 = vld [vmem:[#allocation2 + $0x81] sm:$0xff]
      %v399 = vld [vmem:[#allocation2 + $0x91] sm:$0xff]
      %v400 = vld [vmem:[#allocation2 + $0x99] sm:$0xff]
      %v401 = vld [vmem:[#allocation2 + $0xa9] sm:$0xff]
      %v402 = vld [vmem:[#allocation2 + $0xb1] sm:$0xff]
      %v403 = vld [vmem:[#allocation2 + $0xc1] sm:$0xff]
      %v404 = vld [vmem:[#allocation2 + $0xc9] sm:$0xff]
      %v405 = vld [vmem:[#allocation2 + $0xd9] sm:$0xff]
      %v406 = vld [vmem:[#allocation2 + $0xe1] sm:$0xff]
      %v407 = vld [vmem:[#allocation2 + $0xf1] sm:$0xff]
      %v408 = vld [vmem:[#allocation2 + $0xf9] sm:$0xff]
      %v409 = vld [vmem:[#allocation2 + $0x109] sm:$0xff]
      %v410 = vld [vmem:[#allocation2 + $0x111] sm:$0xff]
      %v411 = vld [vmem:[#allocation2 + $0x121] sm:$0xff]
      %v412 = vld [vmem:[#allocation2 + $0x129] sm:$0xff]
      %v413 = vld [vmem:[#allocation2 + $0x139] sm:$0xff]
      %v414 = vld [vmem:[#allocation2 + $0x141] sm:$0xff]
      %v415 = vld [vmem:[#allocation2 + $0x151] sm:$0xff]
      %v416 = vld [vmem:[#allocation2 + $0x159] sm:$0xff]
      %v417 = vld [vmem:[#allocation2 + $0x169] sm:$0xff]
      %v418 = vld [vmem:[#allocation2 + $0x171] sm:$0xff]
      %v419 = vld [vmem:[#allocation2 + $0x2] sm:$0xff]
      %v420 = vld [vmem:[#allocation2 + $0xa] sm:$0xff]
      %v421 = vld [vmem:[#allocation2 + $0x1a] sm:$0xff]
      %v422 = vld [vmem:[#allocation2 + $0x22] sm:$0xff]
      %v423 = vld [vmem:[#allocation2 + $0x32] sm:$0xff]
      %v424 = vld [vmem:[#allocation2 + $0x3a] sm:$0xff]
      %v425 = vld [vmem:[#allocation2 + $0x4a] sm:$0xff]
      %v426 = vld [vmem:[#allocation2 + $0x52] sm:$0xff]
      %v427 = vld [vmem:[#allocation2 + $0x62] sm:$0xff]
      %v428 = vld [vmem:[#allocation2 + $0x6a] sm:$0xff]
      %v429 = vld [vmem:[#allocation2 + $0x7a] sm:$0xff]
      %v430 = vld [vmem:[#allocation2 + $0x82] sm:$0xff]
      %v431 = vld [vmem:[#allocation2 + $0x92] sm:$0xff]
      %v432 = vld [vmem:[#allocation2 + $0x9a] sm:$0xff]
      %v433 = vld [vmem:[#allocation2 + $0xaa] sm:$0xff]
      %v434 = vld [vmem:[#allocation2 + $0xb2] sm:$0xff]
      %v435 = vld [vmem:[#allocation2 + $0xc2] sm:$0xff]
      %v436 = vld [vmem:[#allocation2 + $0xca] sm:$0xff]
      %v437 = vld [vmem:[#allocation2 + $0xda] sm:$0xff]
      %v438 = vld [vmem:[#allocation2 + $0xe2] sm:$0xff]
      %v439 = vld [vmem:[#allocation2 + $0xf2] sm:$0xff]
      %v440 = vld [vmem:[#allocation2 + $0xfa] sm:$0xff]
      %v441 = vld [vmem:[#allocation2 + $0x10a] sm:$0xff]
      %v442 = vld [vmem:[#allocation2 + $0x112] sm:$0xff]
      %v443 = vld [vmem:[#allocation2 + $0x122] sm:$0xff]
      %v444 = vld [vmem:[#allocation2 + $0x12a] sm:$0xff]
      %v445 = vld [vmem:[#allocation2 + $0x13a] sm:$0xff]
      %v446 = vld [vmem:[#allocation2 + $0x142] sm:$0xff]
      %v447 = vld [vmem:[#allocation2 + $0x152] sm:$0xff]
      %v448 = vld [vmem:[#allocation2 + $0x15a] sm:$0xff]
      %v449 = vld [vmem:[#allocation2 + $0x16a] sm:$0xff]
      %v450 = vld [vmem:[#allocation2 + $0x172] sm:$0xff]
      %v451 = vld [vmem:[%s321] sm:$0xff]
      %v452 = vld [vmem:[%s321 + $0x8] sm:$0xff]
      %v453 = vld [vmem:[%s321 + $0x18] sm:$0xff]
      %v454 = vld [vmem:[%s321 + $0x20] sm:$0xff]
      %v455 = vld [vmem:[%s321 + $0x30] sm:$0xff]
      %v456 = vld [vmem:[%s321 + $0x38] sm:$0xff]
      %v457 = vld [vmem:[%s321 + $0x48] sm:$0xff]
      %v458 = vld [vmem:[%s321 + $0x50] sm:$0xff]
      %v459 = vld [vmem:[%s321 + $0x60] sm:$0xff]
      %v460 = vld [vmem:[%s321 + $0x68] sm:$0xff]
      %v461 = vld [vmem:[%s321 + $0x78] sm:$0xff]
      %v462 = vld [vmem:[%s321 + $0x80] sm:$0xff]
      %v463 = vld [vmem:[%s321 + $0x90] sm:$0xff]
      %v464 = vld [vmem:[%s321 + $0x98] sm:$0xff]
      %v465 = vld [vmem:[%s321 + $0xa8] sm:$0xff]
      %v466 = vld [vmem:[%s321 + $0xb0] sm:$0xff]
      %v467 = vld [vmem:[%s321 + $0xc0] sm:$0xff]
      %v468 = vld [vmem:[%s321 + $0xc8] sm:$0xff]
      %v469 = vld [vmem:[%s321 + $0xd8] sm:$0xff]
      %v470 = vld [vmem:[%s321 + $0xe0] sm:$0xff]
      %v471 = vld [vmem:[%s321 + $0xf0] sm:$0xff]
      %v472 = vld [vmem:[%s321 + $0xf8] sm:$0xff]
      %v473 = vld [vmem:[%s321 + $0x108] sm:$0xff]
      %v474 = vld [vmem:[%s321 + $0x110] sm:$0xff]
      %v475 = vld [vmem:[%s321 + $0x120] sm:$0xff]
      %v476 = vld [vmem:[%s321 + $0x128] sm:$0xff]
      %v477 = vld [vmem:[%s321 + $0x138] sm:$0xff]
      %v478 = vld [vmem:[%s321 + $0x140] sm:$0xff]
      %v479 = vld [vmem:[%s321 + $0x150] sm:$0xff]
      %v480 = vld [vmem:[%s321 + $0x158] sm:$0xff]
      %v481 = vld [vmem:[%s321 + $0x168] sm:$0xff]
      %v482 = vld [vmem:[%s321 + $0x170] sm:$0xff]
      %v483 = vld [vmem:[%s321 + $0x1] sm:$0xff]
      %v484 = vld [vmem:[%s321 + $0x9] sm:$0xff]
      %v485 = vld [vmem:[%s321 + $0x19] sm:$0xff]
      %v486 = vld [vmem:[%s321 + $0x21] sm:$0xff]
      %v487 = vld [vmem:[%s321 + $0x31] sm:$0xff]
      %v488 = vld [vmem:[%s321 + $0x39] sm:$0xff]
      %v489 = vld [vmem:[%s321 + $0x49] sm:$0xff]
      %v490 = vld [vmem:[%s321 + $0x51] sm:$0xff]
      %v491 = vld [vmem:[%s321 + $0x61] sm:$0xff]
      %v492 = vld [vmem:[%s321 + $0x69] sm:$0xff]
      %v493 = vld [vmem:[%s321 + $0x79] sm:$0xff]
      %v494 = vld [vmem:[%s321 + $0x81] sm:$0xff]
      %v495 = vld [vmem:[%s321 + $0x91] sm:$0xff]
      %v496 = vld [vmem:[%s321 + $0x99] sm:$0xff]
      %v497 = vld [vmem:[%s321 + $0xa9] sm:$0xff]
      %v498 = vld [vmem:[%s321 + $0xb1] sm:$0xff]
      %v499 = vld [vmem:[%s321 + $0xc1] sm:$0xff]
      %v500 = vld [vmem:[%s321 + $0xc9] sm:$0xff]
      %v501 = vld [vmem:[%s321 + $0xd9] sm:$0xff]
      %v502 = vld [vmem:[%s321 + $0xe1] sm:$0xff]
      %v503 = vld [vmem:[%s321 + $0xf1] sm:$0xff]
      %v504 = vld [vmem:[%s321 + $0xf9] sm:$0xff]
      %v505 = vld [vmem:[%s321 + $0x109] sm:$0xff]
      %v506 = vld [vmem:[%s321 + $0x111] sm:$0xff]
      %v507 = vld [vmem:[%s321 + $0x121] sm:$0xff]
      %v508 = vld [vmem:[%s321 + $0x129] sm:$0xff]
      %v509 = vld [vmem:[%s321 + $0x139] sm:$0xff]
      %v510 = vld [vmem:[%s321 + $0x141] sm:$0xff]
      %v511 = vld [vmem:[%s321 + $0x151] sm:$0xff]
      %v512 = vld [vmem:[%s321 + $0x159] sm:$0xff]
      %v513 = vld [vmem:[%s321 + $0x169] sm:$0xff]
      %v514 = vld [vmem:[%s321 + $0x171] sm:$0xff]
      %v515 = vld [vmem:[%s321 + $0x2] sm:$0xff]
      %v516 = vld [vmem:[%s321 + $0xa] sm:$0xff]
      %v517 = vld [vmem:[%s321 + $0x1a] sm:$0xff]
      %v518 = vld [vmem:[%s321 + $0x22] sm:$0xff]
      %v519 = vld [vmem:[%s321 + $0x32] sm:$0xff]
      %v520 = vld [vmem:[%s321 + $0x3a] sm:$0xff]
      %v521 = vld [vmem:[%s321 + $0x4a] sm:$0xff]
      %v522 = vld [vmem:[%s321 + $0x52] sm:$0xff]
      %v523 = vld [vmem:[%s321 + $0x62] sm:$0xff]
      %v524 = vld [vmem:[%s321 + $0x6a] sm:$0xff]
      %v525 = vld [vmem:[%s321 + $0x7a] sm:$0xff]
      %v526 = vld [vmem:[%s321 + $0x82] sm:$0xff]
      %v527 = vld [vmem:[%s321 + $0x92] sm:$0xff]
      %v528 = vld [vmem:[%s321 + $0x9a] sm:$0xff]
      %v529 = vld [vmem:[%s321 + $0xaa] sm:$0xff]
      %v530 = vld [vmem:[%s321 + $0xb2] sm:$0xff]
      %v531 = vld [vmem:[%s321 + $0xc2] sm:$0xff]
      %v532 = vld [vmem:[%s321 + $0xca] sm:$0xff]
      %v533 = vld [vmem:[%s321 + $0xda] sm:$0xff]
      %v534 = vld [vmem:[%s321 + $0xe2] sm:$0xff]
      %v535 = vld [vmem:[%s321 + $0xf2] sm:$0xff]
      %v536 = vld [vmem:[%s321 + $0xfa] sm:$0xff]
      %v537 = vld [vmem:[%s321 + $0x10a] sm:$0xff]
      %v538 = vld [vmem:[%s321 + $0x112] sm:$0xff]
      %v539 = vld [vmem:[%s321 + $0x122] sm:$0xff]
      %v540 = vld [vmem:[%s321 + $0x12a] sm:$0xff]
      %v541 = vld [vmem:[%s321 + $0x13a] sm:$0xff]
      %v542 = vld [vmem:[%s321 + $0x142] sm:$0xff]
      %v543 = vld [vmem:[%s321 + $0x152] sm:$0xff]
      %v544 = vld [vmem:[%s321 + $0x15a] sm:$0xff]
      %v545 = vld [vmem:[%s321 + $0x16a] sm:$0xff]
      %v546 = vld [vmem:[%s321 + $0x172] sm:$0xff]
      %s547 = scalar_lea.vmem [#allocation2], 48
      %v548 = vld [vmem:[%s547] sm:$0xff]
      %v549 = vld [vmem:[%s547 + $0x8] sm:$0xff]
      %v550 = vld [vmem:[%s547 + $0x18] sm:$0xff]
      %v551 = vld [vmem:[%s547 + $0x20] sm:$0xff]
      %v552 = vld [vmem:[%s547 + $0x30] sm:$0xff]
      %v553 = vld [vmem:[%s547 + $0x38] sm:$0xff]
      %v554 = vld [vmem:[%s547 + $0x48] sm:$0xff]
      %v555 = vld [vmem:[%s547 + $0x50] sm:$0xff]
      %v556 = vld [vmem:[%s547 + $0x60] sm:$0xff]
      %v557 = vld [vmem:[%s547 + $0x68] sm:$0xff]
      %v558 = vld [vmem:[%s547 + $0x78] sm:$0xff]
      %v559 = vld [vmem:[%s547 + $0x80] sm:$0xff]
      %v560 = vld [vmem:[%s547 + $0x90] sm:$0xff]
      %v561 = vld [vmem:[%s547 + $0x98] sm:$0xff]
      %v562 = vld [vmem:[%s547 + $0xa8] sm:$0xff]
      %v563 = vld [vmem:[%s547 + $0xb0] sm:$0xff]
      %v564 = vld [vmem:[%s547 + $0xc0] sm:$0xff]
      %v565 = vld [vmem:[%s547 + $0xc8] sm:$0xff]
      %v566 = vld [vmem:[%s547 + $0xd8] sm:$0xff]
      %v567 = vld [vmem:[%s547 + $0xe0] sm:$0xff]
      %v568 = vld [vmem:[%s547 + $0xf0] sm:$0xff]
      %v569 = vld [vmem:[%s547 + $0xf8] sm:$0xff]
      %v570 = vld [vmem:[%s547 + $0x108] sm:$0xff]
      %v571 = vld [vmem:[%s547 + $0x110] sm:$0xff]
      %v572 = vld [vmem:[%s547 + $0x120] sm:$0xff]
      %v573 = vld [vmem:[%s547 + $0x128] sm:$0xff]
      %v574 = vld [vmem:[%s547 + $0x138] sm:$0xff]
      %v575 = vld [vmem:[%s547 + $0x140] sm:$0xff]
      %v576 = vld [vmem:[%s547 + $0x150] sm:$0xff]
      %v577 = vld [vmem:[%s547 + $0x158] sm:$0xff]
      %v578 = vld [vmem:[%s547 + $0x168] sm:$0xff]
      %v579 = vld [vmem:[%s547 + $0x170] sm:$0xff]
      %v580 = vld [vmem:[%s547 + $0x1] sm:$0xff]
      %v581 = vld [vmem:[%s547 + $0x9] sm:$0xff]
      %v582 = vld [vmem:[%s547 + $0x19] sm:$0xff]
      %v583 = vld [vmem:[%s547 + $0x21] sm:$0xff]
      %v584 = vld [vmem:[%s547 + $0x31] sm:$0xff]
      %v585 = vld [vmem:[%s547 + $0x39] sm:$0xff]
      %v586 = vld [vmem:[%s547 + $0x49] sm:$0xff]
      %v587 = vld [vmem:[%s547 + $0x51] sm:$0xff]
      %v588 = vld [vmem:[%s547 + $0x61] sm:$0xff]
      %v589 = vld [vmem:[%s547 + $0x69] sm:$0xff]
      %v590 = vld [vmem:[%s547 + $0x79] sm:$0xff]
      %v591 = vld [vmem:[%s547 + $0x81] sm:$0xff]
      %v592 = vld [vmem:[%s547 + $0x91] sm:$0xff]
      %v593 = vld [vmem:[%s547 + $0x99] sm:$0xff]
      %v594 = vld [vmem:[%s547 + $0xa9] sm:$0xff]
      %v595 = vld [vmem:[%s547 + $0xb1] sm:$0xff]
      %v596 = vld [vmem:[%s547 + $0xc1] sm:$0xff]
      %v597 = vld [vmem:[%s547 + $0xc9] sm:$0xff]
      %v598 = vld [vmem:[%s547 + $0xd9] sm:$0xff]
      %v599 = vld [vmem:[%s547 + $0xe1] sm:$0xff]
      %v600 = vld [vmem:[%s547 + $0xf1] sm:$0xff]
      %v601 = vld [vmem:[%s547 + $0xf9] sm:$0xff]
      %v602 = vld [vmem:[%s547 + $0x109] sm:$0xff]
      %v603 = vld [vmem:[%s547 + $0x111] sm:$0xff]
      %v604 = vld [vmem:[%s547 + $0x121] sm:$0xff]
      %v605 = vld [vmem:[%s547 + $0x129] sm:$0xff]
      %v606 = vld [vmem:[%s547 + $0x139] sm:$0xff]
      %v607 = vld [vmem:[%s547 + $0x141] sm:$0xff]
      %v608 = vld [vmem:[%s547 + $0x151] sm:$0xff]
      %v609 = vld [vmem:[%s547 + $0x159] sm:$0xff]
      %v610 = vld [vmem:[%s547 + $0x169] sm:$0xff]
      %v611 = vld [vmem:[%s547 + $0x171] sm:$0xff]
      %v612 = vld [vmem:[%s547 + $0x2] sm:$0xff]
      %v613 = vld [vmem:[%s547 + $0xa] sm:$0xff]
      %v614 = vld [vmem:[%s547 + $0x1a] sm:$0xff]
      %v615 = vld [vmem:[%s547 + $0x22] sm:$0xff]
      %v616 = vld [vmem:[%s547 + $0x32] sm:$0xff]
      %v617 = vld [vmem:[%s547 + $0x3a] sm:$0xff]
      %v618 = vld [vmem:[%s547 + $0x4a] sm:$0xff]
      %v619 = vld [vmem:[%s547 + $0x52] sm:$0xff]
      %v620 = vld [vmem:[%s547 + $0x62] sm:$0xff]
      %v621 = vld [vmem:[%s547 + $0x6a] sm:$0xff]
      %v622 = vld [vmem:[%s547 + $0x7a] sm:$0xff]
      %v623 = vld [vmem:[%s547 + $0x82] sm:$0xff]
      %v624 = vld [vmem:[%s547 + $0x92] sm:$0xff]
      %v625 = vld [vmem:[%s547 + $0x9a] sm:$0xff]
      %v626 = vld [vmem:[%s547 + $0xaa] sm:$0xff]
      %v627 = vld [vmem:[%s547 + $0xb2] sm:$0xff]
      %v628 = vld [vmem:[%s547 + $0xc2] sm:$0xff]
      %v629 = vld [vmem:[%s547 + $0xca] sm:$0xff]
      %v630 = vld [vmem:[%s547 + $0xda] sm:$0xff]
      %v631 = vld [vmem:[%s547 + $0xe2] sm:$0xff]
      %v632 = vld [vmem:[%s547 + $0xf2] sm:$0xff]
      %v633 = vld [vmem:[%s547 + $0xfa] sm:$0xff]
      %v634 = vld [vmem:[%s547 + $0x10a] sm:$0xff]
      %v635 = vld [vmem:[%s547 + $0x112] sm:$0xff]
      %v636 = vld [vmem:[%s547 + $0x122] sm:$0xff]
      %v637 = vld [vmem:[%s547 + $0x12a] sm:$0xff]
      %v638 = vld [vmem:[%s547 + $0x13a] sm:$0xff]
      %v639 = vld [vmem:[%s547 + $0x142] sm:$0xff]
      %v640 = vld [vmem:[%s547 + $0x152] sm:$0xff]
      %v641 = vld [vmem:[%s547 + $0x15a] sm:$0xff]
      %v642 = vld [vmem:[%s547 + $0x16a] sm:$0xff]
      %v643 = vld [vmem:[%s547 + $0x172] sm:$0xff]
      %676 = vrot.lane.b32.xlu0 %v387, 8
      %v677 = vpop.permute.xlu0 %676
      %678 = vrot.lane.b32.xlu0 %v388, 8
      %v679 = vpop.permute.xlu0 %678
      %680 = vrot.lane.b32.xlu0 %v389, 8
      %v681 = vpop.permute.xlu0 %680
      %682 = vrot.lane.b32.xlu0 %v390, 8
      %v683 = vpop.permute.xlu0 %682
      %684 = vrot.lane.b32.xlu0 %v391, 8
      %v685 = vpop.permute.xlu0 %684
      %686 = vrot.lane.b32.xlu0 %v392, 8
      %v687 = vpop.permute.xlu0 %686
      %688 = vrot.lane.b32.xlu0 %v393, 8
      %v689 = vpop.permute.xlu0 %688
      %690 = vrot.lane.b32.xlu0 %v394, 8
      %v691 = vpop.permute.xlu0 %690
      %692 = vrot.lane.b32.xlu0 %v395, 8
      %v693 = vpop.permute.xlu0 %692
      %694 = vrot.lane.b32.xlu0 %v396, 8
      %v695 = vpop.permute.xlu0 %694
      %696 = vrot.lane.b32.xlu0 %v397, 8
      %v697 = vpop.permute.xlu0 %696
      %698 = vrot.lane.b32.xlu0 %v398, 8
      %v699 = vpop.permute.xlu0 %698
      %700 = vrot.lane.b32.xlu0 %v399, 8
      %v701 = vpop.permute.xlu0 %700
      %702 = vrot.lane.b32.xlu0 %v400, 8
      %v703 = vpop.permute.xlu0 %702
      %704 = vrot.lane.b32.xlu0 %v401, 8
      %v705 = vpop.permute.xlu0 %704
      %706 = vrot.lane.b32.xlu0 %v402, 8
      %v707 = vpop.permute.xlu0 %706
      %708 = vrot.lane.b32.xlu0 %v403, 8
      %v709 = vpop.permute.xlu0 %708
      %710 = vrot.lane.b32.xlu0 %v404, 8
      %v711 = vpop.permute.xlu0 %710
      %712 = vrot.lane.b32.xlu0 %v405, 8
      %v713 = vpop.permute.xlu0 %712
      %714 = vrot.lane.b32.xlu0 %v406, 8
      %v715 = vpop.permute.xlu0 %714
      %716 = vrot.lane.b32.xlu0 %v407, 8
      %v717 = vpop.permute.xlu0 %716
      %718 = vrot.lane.b32.xlu0 %v408, 8
      %v719 = vpop.permute.xlu0 %718
      %720 = vrot.lane.b32.xlu0 %v409, 8
      %v721 = vpop.permute.xlu0 %720
      %722 = vrot.lane.b32.xlu0 %v410, 8
      %v723 = vpop.permute.xlu0 %722
      %724 = vrot.lane.b32.xlu0 %v411, 8
      %v725 = vpop.permute.xlu0 %724
      %726 = vrot.lane.b32.xlu0 %v412, 8
      %v727 = vpop.permute.xlu0 %726
      %728 = vrot.lane.b32.xlu0 %v413, 8
      %v729 = vpop.permute.xlu0 %728
      %730 = vrot.lane.b32.xlu0 %v414, 8
      %v731 = vpop.permute.xlu0 %730
      %732 = vrot.lane.b32.xlu0 %v415, 8
      %v733 = vpop.permute.xlu0 %732
      %734 = vrot.lane.b32.xlu0 %v416, 8
      %v735 = vpop.permute.xlu0 %734
      %736 = vrot.lane.b32.xlu0 %v417, 8
      %v737 = vpop.permute.xlu0 %736
      %738 = vrot.lane.b32.xlu0 %v418, 8
      %v739 = vpop.permute.xlu0 %738
      %804 = vrot.lane.b32.xlu0 %v419, 16
      %v805 = vpop.permute.xlu0 %804
      %806 = vrot.lane.b32.xlu0 %v420, 16
      %v807 = vpop.permute.xlu0 %806
      %808 = vrot.lane.b32.xlu0 %v421, 16
      %v809 = vpop.permute.xlu0 %808
      %810 = vrot.lane.b32.xlu0 %v422, 16
      %v811 = vpop.permute.xlu0 %810
      %812 = vrot.lane.b32.xlu0 %v423, 16
      %v813 = vpop.permute.xlu0 %812
      %814 = vrot.lane.b32.xlu0 %v424, 16
      %v815 = vpop.permute.xlu0 %814
      %816 = vrot.lane.b32.xlu0 %v425, 16
      %v817 = vpop.permute.xlu0 %816
      %818 = vrot.lane.b32.xlu0 %v426, 16
      %v819 = vpop.permute.xlu0 %818
      %820 = vrot.lane.b32.xlu0 %v427, 16
      %v821 = vpop.permute.xlu0 %820
      %822 = vrot.lane.b32.xlu0 %v428, 16
      %v823 = vpop.permute.xlu0 %822
      %824 = vrot.lane.b32.xlu0 %v429, 16
      %v825 = vpop.permute.xlu0 %824
      %826 = vrot.lane.b32.xlu0 %v430, 16
      %v827 = vpop.permute.xlu0 %826
      %828 = vrot.lane.b32.xlu0 %v431, 16
      %v829 = vpop.permute.xlu0 %828
      %830 = vrot.lane.b32.xlu0 %v432, 16
      %v831 = vpop.permute.xlu0 %830
      %832 = vrot.lane.b32.xlu0 %v433, 16
      %v833 = vpop.permute.xlu0 %832
      %834 = vrot.lane.b32.xlu0 %v434, 16
      %v835 = vpop.permute.xlu0 %834
      %836 = vrot.lane.b32.xlu0 %v435, 16
      %v837 = vpop.permute.xlu0 %836
      %838 = vrot.lane.b32.xlu0 %v436, 16
      %v839 = vpop.permute.xlu0 %838
      %840 = vrot.lane.b32.xlu0 %v437, 16
      %v841 = vpop.permute.xlu0 %840
      %842 = vrot.lane.b32.xlu0 %v438, 16
      %v843 = vpop.permute.xlu0 %842
      %844 = vrot.lane.b32.xlu0 %v439, 16
      %v845 = vpop.permute.xlu0 %844
      %846 = vrot.lane.b32.xlu0 %v440, 16
      %v847 = vpop.permute.xlu0 %846
      %848 = vrot.lane.b32.xlu0 %v441, 16
      %v849 = vpop.permute.xlu0 %848
      %850 = vrot.lane.b32.xlu0 %v442, 16
      %v851 = vpop.permute.xlu0 %850
      %852 = vrot.lane.b32.xlu0 %v443, 16
      %v853 = vpop.permute.xlu0 %852
      %854 = vrot.lane.b32.xlu0 %v444, 16
      %v855 = vpop.permute.xlu0 %854
      %856 = vrot.lane.b32.xlu0 %v445, 16
      %v857 = vpop.permute.xlu0 %856
      %858 = vrot.lane.b32.xlu0 %v446, 16
      %v859 = vpop.permute.xlu0 %858
      %860 = vrot.lane.b32.xlu0 %v447, 16
      %v861 = vpop.permute.xlu0 %860
      %862 = vrot.lane.b32.xlu0 %v448, 16
      %v863 = vpop.permute.xlu0 %862
      %864 = vrot.lane.b32.xlu0 %v449, 16
      %v865 = vpop.permute.xlu0 %864
      %866 = vrot.lane.b32.xlu0 %v450, 16
      %v867 = vpop.permute.xlu0 %866
      %932 = vrot.lane.b32.xlu0 %v451, 24
      %v933 = vpop.permute.xlu0 %932
      %934 = vrot.lane.b32.xlu0 %v452, 24
      %v935 = vpop.permute.xlu0 %934
      %936 = vrot.lane.b32.xlu0 %v453, 24
      %v937 = vpop.permute.xlu0 %936
      %938 = vrot.lane.b32.xlu0 %v454, 24
      %v939 = vpop.permute.xlu0 %938
      %940 = vrot.lane.b32.xlu0 %v455, 24
      %v941 = vpop.permute.xlu0 %940
      %942 = vrot.lane.b32.xlu0 %v456, 24
      %v943 = vpop.permute.xlu0 %942
      %944 = vrot.lane.b32.xlu0 %v457, 24
      %v945 = vpop.permute.xlu0 %944
      %946 = vrot.lane.b32.xlu0 %v458, 24
      %v947 = vpop.permute.xlu0 %946
      %948 = vrot.lane.b32.xlu0 %v459, 24
      %v949 = vpop.permute.xlu0 %948
      %950 = vrot.lane.b32.xlu0 %v460, 24
      %v951 = vpop.permute.xlu0 %950
      %952 = vrot.lane.b32.xlu0 %v461, 24
      %v953 = vpop.permute.xlu0 %952
      %954 = vrot.lane.b32.xlu0 %v462, 24
      %v955 = vpop.permute.xlu0 %954
      %956 = vrot.lane.b32.xlu0 %v463, 24
      %v957 = vpop.permute.xlu0 %956
      %958 = vrot.lane.b32.xlu0 %v464, 24
      %v959 = vpop.permute.xlu0 %958
      %960 = vrot.lane.b32.xlu0 %v465, 24
      %v961 = vpop.permute.xlu0 %960
      %962 = vrot.lane.b32.xlu0 %v466, 24
      %v963 = vpop.permute.xlu0 %962
      %964 = vrot.lane.b32.xlu0 %v467, 24
      %v965 = vpop.permute.xlu0 %964
      %966 = vrot.lane.b32.xlu0 %v468, 24
      %v967 = vpop.permute.xlu0 %966
      %968 = vrot.lane.b32.xlu0 %v469, 24
      %v969 = vpop.permute.xlu0 %968
      %970 = vrot.lane.b32.xlu0 %v470, 24
      %v971 = vpop.permute.xlu0 %970
      %972 = vrot.lane.b32.xlu0 %v471, 24
      %v973 = vpop.permute.xlu0 %972
      %974 = vrot.lane.b32.xlu0 %v472, 24
      %v975 = vpop.permute.xlu0 %974
      %976 = vrot.lane.b32.xlu0 %v473, 24
      %v977 = vpop.permute.xlu0 %976
      %978 = vrot.lane.b32.xlu0 %v474, 24
      %v979 = vpop.permute.xlu0 %978
      %980 = vrot.lane.b32.xlu0 %v475, 24
      %v981 = vpop.permute.xlu0 %980
      %982 = vrot.lane.b32.xlu0 %v476, 24
      %v983 = vpop.permute.xlu0 %982
      %984 = vrot.lane.b32.xlu0 %v477, 24
      %v985 = vpop.permute.xlu0 %984
      %986 = vrot.lane.b32.xlu0 %v478, 24
      %v987 = vpop.permute.xlu0 %986
      %988 = vrot.lane.b32.xlu0 %v479, 24
      %v989 = vpop.permute.xlu0 %988
      %990 = vrot.lane.b32.xlu0 %v480, 24
      %v991 = vpop.permute.xlu0 %990
      %992 = vrot.lane.b32.xlu0 %v481, 24
      %v993 = vpop.permute.xlu0 %992
      %994 = vrot.lane.b32.xlu0 %v482, 24
      %v995 = vpop.permute.xlu0 %994
      %1060 = vrot.lane.b32.xlu0 %v483, 32
      %v1061 = vpop.permute.xlu0 %1060
      %1062 = vrot.lane.b32.xlu0 %v484, 32
      %v1063 = vpop.permute.xlu0 %1062
      %1064 = vrot.lane.b32.xlu0 %v485, 32
      %v1065 = vpop.permute.xlu0 %1064
      %1066 = vrot.lane.b32.xlu0 %v486, 32
      %v1067 = vpop.permute.xlu0 %1066
      %1068 = vrot.lane.b32.xlu0 %v487, 32
      %v1069 = vpop.permute.xlu0 %1068
      %1070 = vrot.lane.b32.xlu0 %v488, 32
      %v1071 = vpop.permute.xlu0 %1070
      %1072 = vrot.lane.b32.xlu0 %v489, 32
      %v1073 = vpop.permute.xlu0 %1072
      %1074 = vrot.lane.b32.xlu0 %v490, 32
      %v1075 = vpop.permute.xlu0 %1074
      %1076 = vrot.lane.b32.xlu0 %v491, 32
      %v1077 = vpop.permute.xlu0 %1076
      %1078 = vrot.lane.b32.xlu0 %v492, 32
      %v1079 = vpop.permute.xlu0 %1078
      %1080 = vrot.lane.b32.xlu0 %v493, 32
      %v1081 = vpop.permute.xlu0 %1080
      %1082 = vrot.lane.b32.xlu0 %v494, 32
      %v1083 = vpop.permute.xlu0 %1082
      %1084 = vrot.lane.b32.xlu0 %v495, 32
      %v1085 = vpop.permute.xlu0 %1084
      %1086 = vrot.lane.b32.xlu0 %v496, 32
      %v1087 = vpop.permute.xlu0 %1086
      %1088 = vrot.lane.b32.xlu0 %v497, 32
      %v1089 = vpop.permute.xlu0 %1088
      %1090 = vrot.lane.b32.xlu0 %v498, 32
      %v1091 = vpop.permute.xlu0 %1090
      %1092 = vrot.lane.b32.xlu0 %v499, 32
      %v1093 = vpop.permute.xlu0 %1092
      %1094 = vrot.lane.b32.xlu0 %v500, 32
      %v1095 = vpop.permute.xlu0 %1094
      %1096 = vrot.lane.b32.xlu0 %v501, 32
      %v1097 = vpop.permute.xlu0 %1096
      %1098 = vrot.lane.b32.xlu0 %v502, 32
      %v1099 = vpop.permute.xlu0 %1098
      %1100 = vrot.lane.b32.xlu0 %v503, 32
      %v1101 = vpop.permute.xlu0 %1100
      %1102 = vrot.lane.b32.xlu0 %v504, 32
      %v1103 = vpop.permute.xlu0 %1102
      %1104 = vrot.lane.b32.xlu0 %v505, 32
      %v1105 = vpop.permute.xlu0 %1104
      %1106 = vrot.lane.b32.xlu0 %v506, 32
      %v1107 = vpop.permute.xlu0 %1106
      %1108 = vrot.lane.b32.xlu0 %v507, 32
      %v1109 = vpop.permute.xlu0 %1108
      %1110 = vrot.lane.b32.xlu0 %v508, 32
      %v1111 = vpop.permute.xlu0 %1110
      %1112 = vrot.lane.b32.xlu0 %v509, 32
      %v1113 = vpop.permute.xlu0 %1112
      %1114 = vrot.lane.b32.xlu0 %v510, 32
      %v1115 = vpop.permute.xlu0 %1114
      %1116 = vrot.lane.b32.xlu0 %v511, 32
      %v1117 = vpop.permute.xlu0 %1116
      %1118 = vrot.lane.b32.xlu0 %v512, 32
      %v1119 = vpop.permute.xlu0 %1118
      %1120 = vrot.lane.b32.xlu0 %v513, 32
      %v1121 = vpop.permute.xlu0 %1120
      %1122 = vrot.lane.b32.xlu0 %v514, 32
      %v1123 = vpop.permute.xlu0 %1122
      %1188 = vrot.lane.b32.xlu0 %v515, 40
      %v1189 = vpop.permute.xlu0 %1188
      %1190 = vrot.lane.b32.xlu0 %v516, 40
      %v1191 = vpop.permute.xlu0 %1190
      %1192 = vrot.lane.b32.xlu0 %v517, 40
      %v1193 = vpop.permute.xlu0 %1192
      %1194 = vrot.lane.b32.xlu0 %v518, 40
      %v1195 = vpop.permute.xlu0 %1194
      %1196 = vrot.lane.b32.xlu0 %v519, 40
      %v1197 = vpop.permute.xlu0 %1196
      %1198 = vrot.lane.b32.xlu0 %v520, 40
      %v1199 = vpop.permute.xlu0 %1198
      %1200 = vrot.lane.b32.xlu0 %v521, 40
      %v1201 = vpop.permute.xlu0 %1200
      %1202 = vrot.lane.b32.xlu0 %v522, 40
      %v1203 = vpop.permute.xlu0 %1202
      %1204 = vrot.lane.b32.xlu0 %v523, 40
      %v1205 = vpop.permute.xlu0 %1204
      %1206 = vrot.lane.b32.xlu0 %v524, 40
      %v1207 = vpop.permute.xlu0 %1206
      %1208 = vrot.lane.b32.xlu0 %v525, 40
      %v1209 = vpop.permute.xlu0 %1208
      %1210 = vrot.lane.b32.xlu0 %v526, 40
      %v1211 = vpop.permute.xlu0 %1210
      %1212 = vrot.lane.b32.xlu0 %v527, 40
      %v1213 = vpop.permute.xlu0 %1212
      %1214 = vrot.lane.b32.xlu0 %v528, 40
      %v1215 = vpop.permute.xlu0 %1214
      %1216 = vrot.lane.b32.xlu0 %v529, 40
      %v1217 = vpop.permute.xlu0 %1216
      %1218 = vrot.lane.b32.xlu0 %v530, 40
      %v1219 = vpop.permute.xlu0 %1218
      %1220 = vrot.lane.b32.xlu0 %v531, 40
      %v1221 = vpop.permute.xlu0 %1220
      %1222 = vrot.lane.b32.xlu0 %v532, 40
      %v1223 = vpop.permute.xlu0 %1222
      %1224 = vrot.lane.b32.xlu0 %v533, 40
      %v1225 = vpop.permute.xlu0 %1224
      %1226 = vrot.lane.b32.xlu0 %v534, 40
      %v1227 = vpop.permute.xlu0 %1226
      %1228 = vrot.lane.b32.xlu0 %v535, 40
      %v1229 = vpop.permute.xlu0 %1228
      %1230 = vrot.lane.b32.xlu0 %v536, 40
      %v1231 = vpop.permute.xlu0 %1230
      %1232 = vrot.lane.b32.xlu0 %v537, 40
      %v1233 = vpop.permute.xlu0 %1232
      %1234 = vrot.lane.b32.xlu0 %v538, 40
      %v1235 = vpop.permute.xlu0 %1234
      %1236 = vrot.lane.b32.xlu0 %v539, 40
      %v1237 = vpop.permute.xlu0 %1236
      %1238 = vrot.lane.b32.xlu0 %v540, 40
      %v1239 = vpop.permute.xlu0 %1238
      %1240 = vrot.lane.b32.xlu0 %v541, 40
      %v1241 = vpop.permute.xlu0 %1240
      %1242 = vrot.lane.b32.xlu0 %v542, 40
      %v1243 = vpop.permute.xlu0 %1242
      %1244 = vrot.lane.b32.xlu0 %v543, 40
      %v1245 = vpop.permute.xlu0 %1244
      %1246 = vrot.lane.b32.xlu0 %v544, 40
      %v1247 = vpop.permute.xlu0 %1246
      %1248 = vrot.lane.b32.xlu0 %v545, 40
      %v1249 = vpop.permute.xlu0 %1248
      %1250 = vrot.lane.b32.xlu0 %v546, 40
      %v1251 = vpop.permute.xlu0 %1250
      %1316 = vrot.lane.b32.xlu0 %v548, 48
      %v1317 = vpop.permute.xlu0 %1316
      %1318 = vrot.lane.b32.xlu0 %v549, 48
      %v1319 = vpop.permute.xlu0 %1318
      %1320 = vrot.lane.b32.xlu0 %v550, 48
      %v1321 = vpop.permute.xlu0 %1320
      %1322 = vrot.lane.b32.xlu0 %v551, 48
      %v1323 = vpop.permute.xlu0 %1322
      %1324 = vrot.lane.b32.xlu0 %v552, 48
      %v1325 = vpop.permute.xlu0 %1324
      %1326 = vrot.lane.b32.xlu0 %v553, 48
      %v1327 = vpop.permute.xlu0 %1326
      %1328 = vrot.lane.b32.xlu0 %v554, 48
      %v1329 = vpop.permute.xlu0 %1328
      %1330 = vrot.lane.b32.xlu0 %v555, 48
      %v1331 = vpop.permute.xlu0 %1330
      %1332 = vrot.lane.b32.xlu0 %v556, 48
      %v1333 = vpop.permute.xlu0 %1332
      %1334 = vrot.lane.b32.xlu0 %v557, 48
      %v1335 = vpop.permute.xlu0 %1334
      %1336 = vrot.lane.b32.xlu0 %v558, 48
      %v1337 = vpop.permute.xlu0 %1336
      %1338 = vrot.lane.b32.xlu0 %v559, 48
      %v1339 = vpop.permute.xlu0 %1338
      %1340 = vrot.lane.b32.xlu0 %v560, 48
      %v1341 = vpop.permute.xlu0 %1340
      %1342 = vrot.lane.b32.xlu0 %v561, 48
      %v1343 = vpop.permute.xlu0 %1342
      %1344 = vrot.lane.b32.xlu0 %v562, 48
      %v1345 = vpop.permute.xlu0 %1344
      %1346 = vrot.lane.b32.xlu0 %v563, 48
      %v1347 = vpop.permute.xlu0 %1346
      %1348 = vrot.lane.b32.xlu0 %v564, 48
      %v1349 = vpop.permute.xlu0 %1348
      %1350 = vrot.lane.b32.xlu0 %v565, 48
      %v1351 = vpop.permute.xlu0 %1350
      %1352 = vrot.lane.b32.xlu0 %v566, 48
      %v1353 = vpop.permute.xlu0 %1352
      %1354 = vrot.lane.b32.xlu0 %v567, 48
      %v1355 = vpop.permute.xlu0 %1354
      %1356 = vrot.lane.b32.xlu0 %v568, 48
      %v1357 = vpop.permute.xlu0 %1356
      %1358 = vrot.lane.b32.xlu0 %v569, 48
      %v1359 = vpop.permute.xlu0 %1358
      %1360 = vrot.lane.b32.xlu0 %v570, 48
      %v1361 = vpop.permute.xlu0 %1360
      %1362 = vrot.lane.b32.xlu0 %v571, 48
      %v1363 = vpop.permute.xlu0 %1362
      %1364 = vrot.lane.b32.xlu0 %v572, 48
      %v1365 = vpop.permute.xlu0 %1364
      %1366 = vrot.lane.b32.xlu0 %v573, 48
      %v1367 = vpop.permute.xlu0 %1366
      %1368 = vrot.lane.b32.xlu0 %v574, 48
      %v1369 = vpop.permute.xlu0 %1368
      %1370 = vrot.lane.b32.xlu0 %v575, 48
      %v1371 = vpop.permute.xlu0 %1370
      %1372 = vrot.lane.b32.xlu0 %v576, 48
      %v1373 = vpop.permute.xlu0 %1372
      %1374 = vrot.lane.b32.xlu0 %v577, 48
      %v1375 = vpop.permute.xlu0 %1374
      %1376 = vrot.lane.b32.xlu0 %v578, 48
      %v1377 = vpop.permute.xlu0 %1376
      %1378 = vrot.lane.b32.xlu0 %v579, 48
      %v1379 = vpop.permute.xlu0 %1378
      %1444 = vrot.lane.b32.xlu0 %v580, 56
      %v1445 = vpop.permute.xlu0 %1444
      %1446 = vrot.lane.b32.xlu0 %v581, 56
      %v1447 = vpop.permute.xlu0 %1446
      %1448 = vrot.lane.b32.xlu0 %v582, 56
      %v1449 = vpop.permute.xlu0 %1448
      %1450 = vrot.lane.b32.xlu0 %v583, 56
      %v1451 = vpop.permute.xlu0 %1450
      %1452 = vrot.lane.b32.xlu0 %v584, 56
      %v1453 = vpop.permute.xlu0 %1452
      %1454 = vrot.lane.b32.xlu0 %v585, 56
      %v1455 = vpop.permute.xlu0 %1454
      %1456 = vrot.lane.b32.xlu0 %v586, 56
      %v1457 = vpop.permute.xlu0 %1456
      %1458 = vrot.lane.b32.xlu0 %v587, 56
      %v1459 = vpop.permute.xlu0 %1458
      %1460 = vrot.lane.b32.xlu0 %v588, 56
      %v1461 = vpop.permute.xlu0 %1460
      %1462 = vrot.lane.b32.xlu0 %v589, 56
      %v1463 = vpop.permute.xlu0 %1462
      %1464 = vrot.lane.b32.xlu0 %v590, 56
      %v1465 = vpop.permute.xlu0 %1464
      %1466 = vrot.lane.b32.xlu0 %v591, 56
      %v1467 = vpop.permute.xlu0 %1466
      %1468 = vrot.lane.b32.xlu0 %v592, 56
      %v1469 = vpop.permute.xlu0 %1468
      %1470 = vrot.lane.b32.xlu0 %v593, 56
      %v1471 = vpop.permute.xlu0 %1470
      %1472 = vrot.lane.b32.xlu0 %v594, 56
      %v1473 = vpop.permute.xlu0 %1472
      %1474 = vrot.lane.b32.xlu0 %v595, 56
      %v1475 = vpop.permute.xlu0 %1474
      %1476 = vrot.lane.b32.xlu0 %v596, 56
      %v1477 = vpop.permute.xlu0 %1476
      %1478 = vrot.lane.b32.xlu0 %v597, 56
      %v1479 = vpop.permute.xlu0 %1478
      %1480 = vrot.lane.b32.xlu0 %v598, 56
      %v1481 = vpop.permute.xlu0 %1480
      %1482 = vrot.lane.b32.xlu0 %v599, 56
      %v1483 = vpop.permute.xlu0 %1482
      %1484 = vrot.lane.b32.xlu0 %v600, 56
      %v1485 = vpop.permute.xlu0 %1484
      %1486 = vrot.lane.b32.xlu0 %v601, 56
      %v1487 = vpop.permute.xlu0 %1486
      %1488 = vrot.lane.b32.xlu0 %v602, 56
      %v1489 = vpop.permute.xlu0 %1488
      %1490 = vrot.lane.b32.xlu0 %v603, 56
      %v1491 = vpop.permute.xlu0 %1490
      %1492 = vrot.lane.b32.xlu0 %v604, 56
      %v1493 = vpop.permute.xlu0 %1492
      %1494 = vrot.lane.b32.xlu0 %v605, 56
      %v1495 = vpop.permute.xlu0 %1494
      %1496 = vrot.lane.b32.xlu0 %v606, 56
      %v1497 = vpop.permute.xlu0 %1496
      %1498 = vrot.lane.b32.xlu0 %v607, 56
      %v1499 = vpop.permute.xlu0 %1498
      %1500 = vrot.lane.b32.xlu0 %v608, 56
      %v1501 = vpop.permute.xlu0 %1500
      %1502 = vrot.lane.b32.xlu0 %v609, 56
      %v1503 = vpop.permute.xlu0 %1502
      %1504 = vrot.lane.b32.xlu0 %v610, 56
      %v1505 = vpop.permute.xlu0 %1504
      %1506 = vrot.lane.b32.xlu0 %v611, 56
      %v1507 = vpop.permute.xlu0 %1506
      %1572 = vrot.lane.b32.xlu0 %v612, 64
      %v1573 = vpop.permute.xlu0 %1572
      %1574 = vrot.lane.b32.xlu0 %v613, 64
      %v1575 = vpop.permute.xlu0 %1574
      %1576 = vrot.lane.b32.xlu0 %v614, 64
      %v1577 = vpop.permute.xlu0 %1576
      %1578 = vrot.lane.b32.xlu0 %v615, 64
      %v1579 = vpop.permute.xlu0 %1578
      %1580 = vrot.lane.b32.xlu0 %v616, 64
      %v1581 = vpop.permute.xlu0 %1580
      %1582 = vrot.lane.b32.xlu0 %v617, 64
      %v1583 = vpop.permute.xlu0 %1582
      %1584 = vrot.lane.b32.xlu0 %v618, 64
      %v1585 = vpop.permute.xlu0 %1584
      %1586 = vrot.lane.b32.xlu0 %v619, 64
      %v1587 = vpop.permute.xlu0 %1586
      %1588 = vrot.lane.b32.xlu0 %v620, 64
      %v1589 = vpop.permute.xlu0 %1588
      %1590 = vrot.lane.b32.xlu0 %v621, 64
      %v1591 = vpop.permute.xlu0 %1590
      %1592 = vrot.lane.b32.xlu0 %v622, 64
      %v1593 = vpop.permute.xlu0 %1592
      %1594 = vrot.lane.b32.xlu0 %v623, 64
      %v1595 = vpop.permute.xlu0 %1594
      %1596 = vrot.lane.b32.xlu0 %v624, 64
      %v1597 = vpop.permute.xlu0 %1596
      %1598 = vrot.lane.b32.xlu0 %v625, 64
      %v1599 = vpop.permute.xlu0 %1598
      %1600 = vrot.lane.b32.xlu0 %v626, 64
      %v1601 = vpop.permute.xlu0 %1600
      %1602 = vrot.lane.b32.xlu0 %v627, 64
      %v1603 = vpop.permute.xlu0 %1602
      %1604 = vrot.lane.b32.xlu0 %v628, 64
      %v1605 = vpop.permute.xlu0 %1604
      %1606 = vrot.lane.b32.xlu0 %v629, 64
      %v1607 = vpop.permute.xlu0 %1606
      %1608 = vrot.lane.b32.xlu0 %v630, 64
      %v1609 = vpop.permute.xlu0 %1608
      %1610 = vrot.lane.b32.xlu0 %v631, 64
      %v1611 = vpop.permute.xlu0 %1610
      %1612 = vrot.lane.b32.xlu0 %v632, 64
      %v1613 = vpop.permute.xlu0 %1612
      %1614 = vrot.lane.b32.xlu0 %v633, 64
      %v1615 = vpop.permute.xlu0 %1614
      %1616 = vrot.lane.b32.xlu0 %v634, 64
      %v1617 = vpop.permute.xlu0 %1616
      %1618 = vrot.lane.b32.xlu0 %v635, 64
      %v1619 = vpop.permute.xlu0 %1618
      %1620 = vrot.lane.b32.xlu0 %v636, 64
      %v1621 = vpop.permute.xlu0 %1620
      %1622 = vrot.lane.b32.xlu0 %v637, 64
      %v1623 = vpop.permute.xlu0 %1622
      %1624 = vrot.lane.b32.xlu0 %v638, 64
      %v1625 = vpop.permute.xlu0 %1624
      %1626 = vrot.lane.b32.xlu0 %v639, 64
      %v1627 = vpop.permute.xlu0 %1626
      %1628 = vrot.lane.b32.xlu0 %v640, 64
      %v1629 = vpop.permute.xlu0 %1628
      %1630 = vrot.lane.b32.xlu0 %v641, 64
      %v1631 = vpop.permute.xlu0 %1630
      %1632 = vrot.lane.b32.xlu0 %v642, 64
      %v1633 = vpop.permute.xlu0 %1632
      %1634 = vrot.lane.b32.xlu0 %v643, 64
      %v1635 = vpop.permute.xlu0 %1634
      %v1668 = vsel %vm322, %v355, %v677
      %v1669 = vsel %vm322, %v356, %v679
      %v1670 = vsel %vm322, %v357, %v681
      %v1671 = vsel %vm322, %v358, %v683
      %v1672 = vsel %vm322, %v359, %v685
      %v1673 = vsel %vm322, %v360, %v687
      %v1674 = vsel %vm322, %v361, %v689
      %v1675 = vsel %vm322, %v362, %v691
      %v1676 = vsel %vm322, %v363, %v693
      %v1677 = vsel %vm322, %v364, %v695
      %v1678 = vsel %vm322, %v365, %v697
      %v1679 = vsel %vm322, %v366, %v699
      %v1680 = vsel %vm322, %v367, %v701
      %v1681 = vsel %vm322, %v368, %v703
      %v1682 = vsel %vm322, %v369, %v705
      %v1683 = vsel %vm322, %v370, %v707
      %v1684 = vsel %vm322, %v371, %v709
      %v1685 = vsel %vm322, %v372, %v711
      %v1686 = vsel %vm322, %v373, %v713
      %v1687 = vsel %vm322, %v374, %v715
      %v1688 = vsel %vm322, %v375, %v717
      %v1689 = vsel %vm322, %v376, %v719
      %v1690 = vsel %vm322, %v377, %v721
      %v1691 = vsel %vm322, %v378, %v723
      %v1692 = vsel %vm322, %v379, %v725
      %v1693 = vsel %vm322, %v380, %v727
      %v1694 = vsel %vm322, %v381, %v729
      %v1695 = vsel %vm322, %v382, %v731
      %v1696 = vsel %vm322, %v383, %v733
      %v1697 = vsel %vm322, %v384, %v735
      %v1698 = vsel %vm322, %v385, %v737
      %v1699 = vsel %vm322, %v386, %v739
      %vm1700 = vcmask 130048
      %v1701 = vsel %vm1700, %v1668, %v805
      %v1702 = vsel %vm1700, %v1669, %v807
      %v1703 = vsel %vm1700, %v1670, %v809
      %v1704 = vsel %vm1700, %v1671, %v811
      %v1705 = vsel %vm1700, %v1672, %v813
      %v1706 = vsel %vm1700, %v1673, %v815
      %v1707 = vsel %vm1700, %v1674, %v817
      %v1708 = vsel %vm1700, %v1675, %v819
      %v1709 = vsel %vm1700, %v1676, %v821
      %v1710 = vsel %vm1700, %v1677, %v823
      %v1711 = vsel %vm1700, %v1678, %v825
      %v1712 = vsel %vm1700, %v1679, %v827
      %v1713 = vsel %vm1700, %v1680, %v829
      %v1714 = vsel %vm1700, %v1681, %v831
      %v1715 = vsel %vm1700, %v1682, %v833
      %v1716 = vsel %vm1700, %v1683, %v835
      %v1717 = vsel %vm1700, %v1684, %v837
      %v1718 = vsel %vm1700, %v1685, %v839
      %v1719 = vsel %vm1700, %v1686, %v841
      %v1720 = vsel %vm1700, %v1687, %v843
      %v1721 = vsel %vm1700, %v1688, %v845
      %v1722 = vsel %vm1700, %v1689, %v847
      %v1723 = vsel %vm1700, %v1690, %v849
      %v1724 = vsel %vm1700, %v1691, %v851
      %v1725 = vsel %vm1700, %v1692, %v853
      %v1726 = vsel %vm1700, %v1693, %v855
      %v1727 = vsel %vm1700, %v1694, %v857
      %v1728 = vsel %vm1700, %v1695, %v859
      %v1729 = vsel %vm1700, %v1696, %v861
      %v1730 = vsel %vm1700, %v1697, %v863
      %v1731 = vsel %vm1700, %v1698, %v865
      %v1732 = vsel %vm1700, %v1699, %v867
      %vm1733 = vcmask 195584
      %v1734 = vsel %vm1733, %v1701, %v933
      %v1735 = vsel %vm1733, %v1702, %v935
      %v1736 = vsel %vm1733, %v1703, %v937
      %v1737 = vsel %vm1733, %v1704, %v939
      %v1738 = vsel %vm1733, %v1705, %v941
      %v1739 = vsel %vm1733, %v1706, %v943
      %v1740 = vsel %vm1733, %v1707, %v945
      %v1741 = vsel %vm1733, %v1708, %v947
      %v1742 = vsel %vm1733, %v1709, %v949
      %v1743 = vsel %vm1733, %v1710, %v951
      %v1744 = vsel %vm1733, %v1711, %v953
      %v1745 = vsel %vm1733, %v1712, %v955
      %v1746 = vsel %vm1733, %v1713, %v957
      %v1747 = vsel %vm1733, %v1714, %v959
      %v1748 = vsel %vm1733, %v1715, %v961
      %v1749 = vsel %vm1733, %v1716, %v963
      %v1750 = vsel %vm1733, %v1717, %v965
      %v1751 = vsel %vm1733, %v1718, %v967
      %v1752 = vsel %vm1733, %v1719, %v969
      %v1753 = vsel %vm1733, %v1720, %v971
      %v1754 = vsel %vm1733, %v1721, %v973
      %v1755 = vsel %vm1733, %v1722, %v975
      %v1756 = vsel %vm1733, %v1723, %v977
      %v1757 = vsel %vm1733, %v1724, %v979
      %v1758 = vsel %vm1733, %v1725, %v981
      %v1759 = vsel %vm1733, %v1726, %v983
      %v1760 = vsel %vm1733, %v1727, %v985
      %v1761 = vsel %vm1733, %v1728, %v987
      %v1762 = vsel %vm1733, %v1729, %v989
      %v1763 = vsel %vm1733, %v1730, %v991
      %v1764 = vsel %vm1733, %v1731, %v993
      %v1765 = vsel %vm1733, %v1732, %v995
      %vm1766 = vcmask 261120
      %v1767 = vsel %vm1766, %v1734, %v1061
      %v1768 = vsel %vm1766, %v1735, %v1063
      %v1769 = vsel %vm1766, %v1736, %v1065
      %v1770 = vsel %vm1766, %v1737, %v1067
      %v1771 = vsel %vm1766, %v1738, %v1069
      %v1772 = vsel %vm1766, %v1739, %v1071
      %v1773 = vsel %vm1766, %v1740, %v1073
      %v1774 = vsel %vm1766, %v1741, %v1075
      %v1775 = vsel %vm1766, %v1742, %v1077
      %v1776 = vsel %vm1766, %v1743, %v1079
      %v1777 = vsel %vm1766, %v1744, %v1081
      %v1778 = vsel %vm1766, %v1745, %v1083
      %v1779 = vsel %vm1766, %v1746, %v1085
      %v1780 = vsel %vm1766, %v1747, %v1087
      %v1781 = vsel %vm1766, %v1748, %v1089
      %v1782 = vsel %vm1766, %v1749, %v1091
      %v1783 = vsel %vm1766, %v1750, %v1093
      %v1784 = vsel %vm1766, %v1751, %v1095
      %v1785 = vsel %vm1766, %v1752, %v1097
      %v1786 = vsel %vm1766, %v1753, %v1099
      %v1787 = vsel %vm1766, %v1754, %v1101
      %v1788 = vsel %vm1766, %v1755, %v1103
      %v1789 = vsel %vm1766, %v1756, %v1105
      %v1790 = vsel %vm1766, %v1757, %v1107
      %v1791 = vsel %vm1766, %v1758, %v1109
      %v1792 = vsel %vm1766, %v1759, %v1111
      %v1793 = vsel %vm1766, %v1760, %v1113
      %v1794 = vsel %vm1766, %v1761, %v1115
      %v1795 = vsel %vm1766, %v1762, %v1117
      %v1796 = vsel %vm1766, %v1763, %v1119
      %v1797 = vsel %vm1766, %v1764, %v1121
      %v1798 = vsel %vm1766, %v1765, %v1123
      %vm1799 = vcmask 326656
      %v1800 = vsel %vm1799, %v1767, %v1189
      %v1801 = vsel %vm1799, %v1768, %v1191
      %v1802 = vsel %vm1799, %v1769, %v1193
      %v1803 = vsel %vm1799, %v1770, %v1195
      %v1804 = vsel %vm1799, %v1771, %v1197
      %v1805 = vsel %vm1799, %v1772, %v1199
      %v1806 = vsel %vm1799, %v1773, %v1201
      %v1807 = vsel %vm1799, %v1774, %v1203
      %v1808 = vsel %vm1799, %v1775, %v1205
      %v1809 = vsel %vm1799, %v1776, %v1207
      %v1810 = vsel %vm1799, %v1777, %v1209
      %v1811 = vsel %vm1799, %v1778, %v1211
      %v1812 = vsel %vm1799, %v1779, %v1213
      %v1813 = vsel %vm1799, %v1780, %v1215
      %v1814 = vsel %vm1799, %v1781, %v1217
      %v1815 = vsel %vm1799, %v1782, %v1219
      %v1816 = vsel %vm1799, %v1783, %v1221
      %v1817 = vsel %vm1799, %v1784, %v1223
      %v1818 = vsel %vm1799, %v1785, %v1225
      %v1819 = vsel %vm1799, %v1786, %v1227
      %v1820 = vsel %vm1799, %v1787, %v1229
      %v1821 = vsel %vm1799, %v1788, %v1231
      %v1822 = vsel %vm1799, %v1789, %v1233
      %v1823 = vsel %vm1799, %v1790, %v1235
      %v1824 = vsel %vm1799, %v1791, %v1237
      %v1825 = vsel %vm1799, %v1792, %v1239
      %v1826 = vsel %vm1799, %v1793, %v1241
      %v1827 = vsel %vm1799, %v1794, %v1243
      %v1828 = vsel %vm1799, %v1795, %v1245
      %v1829 = vsel %vm1799, %v1796, %v1247
      %v1830 = vsel %vm1799, %v1797, %v1249
      %v1831 = vsel %vm1799, %v1798, %v1251
      %vm1832 = vcmask 392192
      %v1833 = vsel %vm1832, %v1800, %v1317
      %v1834 = vsel %vm1832, %v1801, %v1319
      %v1835 = vsel %vm1832, %v1802, %v1321
      %v1836 = vsel %vm1832, %v1803, %v1323
      %v1837 = vsel %vm1832, %v1804, %v1325
      %v1838 = vsel %vm1832, %v1805, %v1327
      %v1839 = vsel %vm1832, %v1806, %v1329
      %v1840 = vsel %vm1832, %v1807, %v1331
      %v1841 = vsel %vm1832, %v1808, %v1333
      %v1842 = vsel %vm1832, %v1809, %v1335
      %v1843 = vsel %vm1832, %v1810, %v1337
      %v1844 = vsel %vm1832, %v1811, %v1339
      %v1845 = vsel %vm1832, %v1812, %v1341
      %v1846 = vsel %vm1832, %v1813, %v1343
      %v1847 = vsel %vm1832, %v1814, %v1345
      %v1848 = vsel %vm1832, %v1815, %v1347
      %v1849 = vsel %vm1832, %v1816, %v1349
      %v1850 = vsel %vm1832, %v1817, %v1351
      %v1851 = vsel %vm1832, %v1818, %v1353
      %v1852 = vsel %vm1832, %v1819, %v1355
      %v1853 = vsel %vm1832, %v1820, %v1357
      %v1854 = vsel %vm1832, %v1821, %v1359
      %v1855 = vsel %vm1832, %v1822, %v1361
      %v1856 = vsel %vm1832, %v1823, %v1363
      %v1857 = vsel %vm1832, %v1824, %v1365
      %v1858 = vsel %vm1832, %v1825, %v1367
      %v1859 = vsel %vm1832, %v1826, %v1369
      %v1860 = vsel %vm1832, %v1827, %v1371
      %v1861 = vsel %vm1832, %v1828, %v1373
      %v1862 = vsel %vm1832, %v1829, %v1375
      %v1863 = vsel %vm1832, %v1830, %v1377
      %v1864 = vsel %vm1832, %v1831, %v1379
      %vm1865 = vcmask 457728
      %v1866 = vsel %vm1865, %v1833, %v1445
      %v1867 = vsel %vm1865, %v1834, %v1447
      %v1868 = vsel %vm1865, %v1835, %v1449
      %v1869 = vsel %vm1865, %v1836, %v1451
      %v1870 = vsel %vm1865, %v1837, %v1453
      %v1871 = vsel %vm1865, %v1838, %v1455
      %v1872 = vsel %vm1865, %v1839, %v1457
      %v1873 = vsel %vm1865, %v1840, %v1459
      %v1874 = vsel %vm1865, %v1841, %v1461
      %v1875 = vsel %vm1865, %v1842, %v1463
      %v1876 = vsel %vm1865, %v1843, %v1465
      %v1877 = vsel %vm1865, %v1844, %v1467
      %v1878 = vsel %vm1865, %v1845, %v1469
      %v1879 = vsel %vm1865, %v1846, %v1471
      %v1880 = vsel %vm1865, %v1847, %v1473
      %v1881 = vsel %vm1865, %v1848, %v1475
      %v1882 = vsel %vm1865, %v1849, %v1477
      %v1883 = vsel %vm1865, %v1850, %v1479
      %v1884 = vsel %vm1865, %v1851, %v1481
      %v1885 = vsel %vm1865, %v1852, %v1483
      %v1886 = vsel %vm1865, %v1853, %v1485
      %v1887 = vsel %vm1865, %v1854, %v1487
      %v1888 = vsel %vm1865, %v1855, %v1489
      %v1889 = vsel %vm1865, %v1856, %v1491
      %v1890 = vsel %vm1865, %v1857, %v1493
      %v1891 = vsel %vm1865, %v1858, %v1495
      %v1892 = vsel %vm1865, %v1859, %v1497
      %v1893 = vsel %vm1865, %v1860, %v1499
      %v1894 = vsel %vm1865, %v1861, %v1501
      %v1895 = vsel %vm1865, %v1862, %v1503
      %v1896 = vsel %vm1865, %v1863, %v1505
      %v1897 = vsel %vm1865, %v1864, %v1507
      %vm1898 = vcmask 523264
      %v1899 = vsel %vm1898, %v1866, %v1573
      %v1900 = vsel %vm1898, %v1867, %v1575
      %v1901 = vsel %vm1898, %v1868, %v1577
      %v1902 = vsel %vm1898, %v1869, %v1579
      %v1903 = vsel %vm1898, %v1870, %v1581
      %v1904 = vsel %vm1898, %v1871, %v1583
      %v1905 = vsel %vm1898, %v1872, %v1585
      %v1906 = vsel %vm1898, %v1873, %v1587
      %v1907 = vsel %vm1898, %v1874, %v1589
      %v1908 = vsel %vm1898, %v1875, %v1591
      %v1909 = vsel %vm1898, %v1876, %v1593
      %v1910 = vsel %vm1898, %v1877, %v1595
      %v1911 = vsel %vm1898, %v1878, %v1597
      %v1912 = vsel %vm1898, %v1879, %v1599
      %v1913 = vsel %vm1898, %v1880, %v1601
      %v1914 = vsel %vm1898, %v1881, %v1603
      %v1915 = vsel %vm1898, %v1882, %v1605
      %v1916 = vsel %vm1898, %v1883, %v1607
      %v1917 = vsel %vm1898, %v1884, %v1609
      %v1918 = vsel %vm1898, %v1885, %v1611
      %v1919 = vsel %vm1898, %v1886, %v1613
      %v1920 = vsel %vm1898, %v1887, %v1615
      %v1921 = vsel %vm1898, %v1888, %v1617
      %v1922 = vsel %vm1898, %v1889, %v1619
      %v1923 = vsel %vm1898, %v1890, %v1621
      %v1924 = vsel %vm1898, %v1891, %v1623
      %v1925 = vsel %vm1898, %v1892, %v1625
      %v1926 = vsel %vm1898, %v1893, %v1627
      %v1927 = vsel %vm1898, %v1894, %v1629
      %v1928 = vsel %vm1898, %v1895, %v1631
      %v1929 = vsel %vm1898, %v1896, %v1633
      %v1930 = vsel %vm1898, %v1897, %v1635
      %v1931 = vld [vmem:[%s1] sm:$0xff]
      %v1932 = vld [vmem:[%s1 + $0x8] sm:$0xff]
      %v1933 = vld [vmem:[%s1 + $0x10] sm:$0xff]
      %v1934 = vld [vmem:[%s1 + $0x18] sm:$0xff]
      %v1935 = vld [vmem:[%s1 + $0x20] sm:$0xff]
      %v1936 = vld [vmem:[%s1 + $0x28] sm:$0xff]
      %v1937 = vld [vmem:[%s1 + $0x30] sm:$0xff]
      %v1938 = vld [vmem:[%s1 + $0x38] sm:$0xff]
      %v1939 = vld [vmem:[%s1 + $0x40] sm:$0xff]
      %v1940 = vld [vmem:[%s2] sm:$0x1]
      %v1942 = vlaneseq
      %v1943 = vshrl.u32 %v1942, 7
      %v1944 = vsub.s32 0, %v1943
      %v1945 = vrot.slane %v1940, %v1944
      %vm1947 = vcmask 588800
      %v1949 = vsel %vm1947, %v1899, 0
      %v1952 = vsel %vm1947, %v1900, 0
      %v1955 = vsel %vm1947, %v1901, 0
      %v1958 = vsel %vm1947, %v1902, 0
      %v1961 = vsel %vm1947, %v1903, 0
      %v1964 = vsel %vm1947, %v1904, 0
      %v1967 = vsel %vm1947, %v1905, 0
      %v1970 = vsel %vm1947, %v1906, 0
      %v1973 = vsel %vm1947, %v1907, 0
      %v1976 = vsel %vm1947, %v1908, 0
      %v1979 = vsel %vm1947, %v1909, 0
      %v1982 = vsel %vm1947, %v1910, 0
      %v1985 = vsel %vm1947, %v1911, 0
      %v1988 = vsel %vm1947, %v1912, 0
      %v1991 = vsel %vm1947, %v1913, 0
      %v1994 = vsel %vm1947, %v1914, 0
      %v1997 = vsel %vm1947, %v1915, 0
      %v2000 = vsel %vm1947, %v1916, 0
      %v2003 = vsel %vm1947, %v1917, 0
      %v2006 = vsel %vm1947, %v1918, 0
      %v2009 = vsel %vm1947, %v1919, 0
      %v2012 = vsel %vm1947, %v1920, 0
      %v2015 = vsel %vm1947, %v1921, 0
      %v2018 = vsel %vm1947, %v1922, 0
      %v2021 = vsel %vm1947, %v1923, 0
      %v2024 = vsel %vm1947, %v1924, 0
      %v2027 = vsel %vm1947, %v1925, 0
      %v2030 = vsel %vm1947, %v1926, 0
      %v2033 = vsel %vm1947, %v1927, 0
      %v2036 = vsel %vm1947, %v1928, 0
      %v2039 = vsel %vm1947, %v1929, 0
      %v2042 = vsel %vm1947, %v1930, 0
      %2044 = vmatprep.subr.mxu0 0.0
      %2045 = vmatpush1.msra.mxu0 %v1931
      %2046 = vmatprep.subr.mxu0 0.0
      %2047 = vmatpush1.msra.mxu0 %v1932
      %2048 = vmatprep.subr.mxu0 0.0
      %2049 = vmatpush1.msra.mxu0 %v1933
      %2050 = vmatprep.subr.mxu0 0.0
      %2051 = vmatpush1.msra.mxu0 %v1934
      %2052 = vmatprep.subr.mxu0 0.0
      %2053 = vmatpush1.msra.mxu0 %v1935
      %2054 = vmatprep.subr.mxu0 0.0
      %2055 = vmatpush1.msra.mxu0 %v1936
      %2056 = vmatprep.subr.mxu0 0.0
      %2057 = vmatpush1.msra.mxu0 %v1937
      %2058 = vmatprep.subr.mxu0 0.0
      %2059 = vmatpush1.msra.mxu0 %v1938
      %2060 = vmatprep.subr.mxu0 0.0
      %2061 = vmatpush1.msra.mxu0 %v1939
      %2062 = vmatprep.subr.mxu0 0.0
      %2063 = vmatpush1.msra.mxu0 0.0
      %2064 = vmatprep.subr.mxu0 0.0
      %2065 = vmatpush1.msra.mxu0 0.0
      %2066 = vmatprep.subr.mxu0 0.0
      %2067 = vmatpush1.msra.mxu0 0.0
      %2068 = vmatprep.subr.mxu0 0.0
      %2069 = vmatpush1.msra.mxu0 0.0
      %2070 = vmatprep.subr.mxu0 0.0
      %2071 = vmatpush1.msra.mxu0 0.0
      %2072 = vmatprep.subr.mxu0 0.0
      %2073 = vmatpush1.msra.mxu0 0.0
      %2074 = vmatprep.subr.mxu0 0.0
      %2075 = vmatpush1.msra.mxu0 0.0
      %2076 = vmatprep.subr.mxu0 0.0
      %2077 = vmatpush1.msra.mxu0 0.0
      %2078 = vmatprep.subr.mxu0 0.0
      %2079 = vmatpush1.msra.mxu0 0.0
      %2080 = vmatprep.subr.mxu0 0.0
      %2081 = vmatpush1.msra.mxu0 0.0
      %2082 = vmatprep.subr.mxu0 0.0
      %2083 = vmatpush1.msra.mxu0 0.0
      %2084 = vmatprep.subr.mxu0 0.0
      %2085 = vmatpush1.msra.mxu0 0.0
      %2086 = vmatprep.subr.mxu0 0.0
      %2087 = vmatpush1.msra.mxu0 0.0
      %2088 = vmatprep.subr.mxu0 0.0
      %2089 = vmatpush1.msra.mxu0 0.0
      %2090 = vmatprep.subr.mxu0 0.0
      %2091 = vmatpush1.msra.mxu0 0.0
      %2092 = vmatprep.subr.mxu0 0.0
      %2093 = vmatpush1.msra.mxu0 0.0
      %2094 = vmatprep.subr.mxu0 0.0
      %2095 = vmatpush1.msra.mxu0 0.0
      %2096 = vmatprep.subr.mxu0 0.0
      %2097 = vmatpush1.msra.mxu0 0.0
      %2098 = vmatprep.subr.mxu0 0.0
      %2099 = vmatpush1.msra.mxu0 0.0
      %2100 = vmatprep.subr.mxu0 0.0
      %2101 = vmatpush1.msra.mxu0 0.0
      %2102 = vmatprep.subr.mxu0 0.0
      %2103 = vmatpush1.msra.mxu0 0.0
      %2104 = vmatprep.subr.mxu0 0.0
      %2105 = vmatpush1.msra.mxu0 0.0
      %2106 = vmatprep.subr.mxu0 0.0
      %2107 = vmatpush1.msra.mxu0 0.0
      %2108 = vmatprep.mubr.f32.mxu0 0.0
      %2109 = vmatmul.mubr.f32.gmra.mrb[0].mxu0 %v1949
      %v2110 = vpop.f32.mrb[0].mxu0
      %v2111 = vadd.f32 %v1945, %v2110
      %v2112 = vpop.f32.mrb[0].mxu0
      %2113 = vmatprep.mubr.f32.mxu0 0.0
      %2114 = vmatmul.mubr.f32.gmra.mrb[0].mxu0 %v1952
      %v2115 = vpop.f32.mrb[0].mxu0
      %v2116 = vadd.f32 %v1945, %v2115
      %v2117 = vpop.f32.mrb[0].mxu0
      %2118 = vmatprep.mubr.f32.mxu0 0.0
      %2119 = vmatmul.mubr.f32.gmra.mrb[0].mxu0 %v1955
      %v2120 = vpop.f32.mrb[0].mxu0
      %v2121 = vadd.f32 %v1945, %v2120
      %v2122 = vpop.f32.mrb[0].mxu0
      %2123 = vmatprep.mubr.f32.mxu0 0.0
      %2124 = vmatmul.mubr.f32.gmra.mrb[0].mxu0 %v1958
      %v2125 = vpop.f32.mrb[0].mxu0
      %v2126 = vadd.f32 %v1945, %v2125
      %v2127 = vpop.f32.mrb[0].mxu0
      %2128 = vmatprep.mubr.f32.mxu0 0.0
      %2129 = vmatmul.mubr.f32.gmra.mrb[0].mxu0 %v1961
      %v2130 = vpop.f32.mrb[0].mxu0
      %v2131 = vadd.f32 %v1945, %v2130
      %v2132 = vpop.f32.mrb[0].mxu0
      %2133 = vmatprep.mubr.f32.mxu0 0.0
      %2134 = vmatmul.mubr.f32.gmra.mrb[0].mxu0 %v1964
      %v2135 = vpop.f32.mrb[0].mxu0
      %v2136 = vadd.f32 %v1945, %v2135
      %v2137 = vpop.f32.mrb[0].mxu0
      %2138 = vmatprep.mubr.f32.mxu0 0.0
      %2139 = vmatmul.mubr.f32.gmra.mrb[0].mxu0 %v1967
      %v2140 = vpop.f32.mrb[0].mxu0
      %v2141 = vadd.f32 %v1945, %v2140
      %v2142 = vpop.f32.mrb[0].mxu0
      %2143 = vmatprep.mubr.f32.mxu0 0.0
      %2144 = vmatmul.mubr.f32.gmra.mrb[0].mxu0 %v1970
      %v2145 = vpop.f32.mrb[0].mxu0
      %v2146 = vadd.f32 %v1945, %v2145
      %v2147 = vpop.f32.mrb[0].mxu0
      %2148 = vmatprep.mubr.f32.mxu0 0.0
      %2149 = vmatmul.mubr.f32.gmra.mrb[0].mxu0 %v1973
      %v2150 = vpop.f32.mrb[0].mxu0
      %v2151 = vadd.f32 %v1945, %v2150
      %v2152 = vpop.f32.mrb[0].mxu0
      %2153 = vmatprep.mubr.f32.mxu0 0.0
      %2154 = vmatmul.mubr.f32.gmra.mrb[0].mxu0 %v1976
      %v2155 = vpop.f32.mrb[0].mxu0
      %v2156 = vadd.f32 %v1945, %v2155
      %v2157 = vpop.f32.mrb[0].mxu0
      %2158 = vmatprep.mubr.f32.mxu0 0.0
      %2159 = vmatmul.mubr.f32.gmra.mrb[0].mxu0 %v1979
      %v2160 = vpop.f32.mrb[0].mxu0
      %v2161 = vadd.f32 %v1945, %v2160
      %v2162 = vpop.f32.mrb[0].mxu0
      %2163 = vmatprep.mubr.f32.mxu0 0.0
      %2164 = vmatmul.mubr.f32.gmra.mrb[0].mxu0 %v1982
      %v2165 = vpop.f32.mrb[0].mxu0
      %v2166 = vadd.f32 %v1945, %v2165
      %v2167 = vpop.f32.mrb[0].mxu0
      %2168 = vmatprep.mubr.f32.mxu0 0.0
      %2169 = vmatmul.mubr.f32.gmra.mrb[0].mxu0 %v1985
      %v2170 = vpop.f32.mrb[0].mxu0
      %v2171 = vadd.f32 %v1945, %v2170
      %v2172 = vpop.f32.mrb[0].mxu0
      %2173 = vmatprep.mubr.f32.mxu0 0.0
      %2174 = vmatmul.mubr.f32.gmra.mrb[0].mxu0 %v1988
      %v2175 = vpop.f32.mrb[0].mxu0
      %v2176 = vadd.f32 %v1945, %v2175
      %v2177 = vpop.f32.mrb[0].mxu0
      %2178 = vmatprep.mubr.f32.mxu0 0.0
      %2179 = vmatmul.mubr.f32.gmra.mrb[0].mxu0 %v1991
      %v2180 = vpop.f32.mrb[0].mxu0
      %v2181 = vadd.f32 %v1945, %v2180
      %v2182 = vpop.f32.mrb[0].mxu0
      %2183 = vmatprep.mubr.f32.mxu0 0.0
      %2184 = vmatmul.mubr.f32.gmra.mrb[0].mxu0 %v1994
      %v2185 = vpop.f32.mrb[0].mxu0
      %v2186 = vadd.f32 %v1945, %v2185
      %v2187 = vpop.f32.mrb[0].mxu0
      %2188 = vmatprep.mubr.f32.mxu0 0.0
      %2189 = vmatmul.mubr.f32.gmra.mrb[0].mxu0 %v1997
      %v2190 = vpop.f32.mrb[0].mxu0
      %v2191 = vadd.f32 %v1945, %v2190
      %v2192 = vpop.f32.mrb[0].mxu0
      %2193 = vmatprep.mubr.f32.mxu0 0.0
      %2194 = vmatmul.mubr.f32.gmra.mrb[0].mxu0 %v2000
      %v2195 = vpop.f32.mrb[0].mxu0
      %v2196 = vadd.f32 %v1945, %v2195
      %v2197 = vpop.f32.mrb[0].mxu0
      %2198 = vmatprep.mubr.f32.mxu0 0.0
      %2199 = vmatmul.mubr.f32.gmra.mrb[0].mxu0 %v2003
      %v2200 = vpop.f32.mrb[0].mxu0
      %v2201 = vadd.f32 %v1945, %v2200
      %v2202 = vpop.f32.mrb[0].mxu0
      %2203 = vmatprep.mubr.f32.mxu0 0.0
      %2204 = vmatmul.mubr.f32.gmra.mrb[0].mxu0 %v2006
      %v2205 = vpop.f32.mrb[0].mxu0
      %v2206 = vadd.f32 %v1945, %v2205
      %v2207 = vpop.f32.mrb[0].mxu0
      %2208 = vmatprep.mubr.f32.mxu0 0.0
      %2209 = vmatmul.mubr.f32.gmra.mrb[0].mxu0 %v2009
      %v2210 = vpop.f32.mrb[0].mxu0
      %v2211 = vadd.f32 %v1945, %v2210
      %v2212 = vpop.f32.mrb[0].mxu0
      %2213 = vmatprep.mubr.f32.mxu0 0.0
      %2214 = vmatmul.mubr.f32.gmra.mrb[0].mxu0 %v2012
      %v2215 = vpop.f32.mrb[0].mxu0
      %v2216 = vadd.f32 %v1945, %v2215
      %v2217 = vpop.f32.mrb[0].mxu0
      %2218 = vmatprep.mubr.f32.mxu0 0.0
      %2219 = vmatmul.mubr.f32.gmra.mrb[0].mxu0 %v2015
      %v2220 = vpop.f32.mrb[0].mxu0
      %v2221 = vadd.f32 %v1945, %v2220
      %v2222 = vpop.f32.mrb[0].mxu0
      %2223 = vmatprep.mubr.f32.mxu0 0.0
      %2224 = vmatmul.mubr.f32.gmra.mrb[0].mxu0 %v2018
      %v2225 = vpop.f32.mrb[0].mxu0
      %v2226 = vadd.f32 %v1945, %v2225
      %v2227 = vpop.f32.mrb[0].mxu0
      %2228 = vmatprep.mubr.f32.mxu0 0.0
      %2229 = vmatmul.mubr.f32.gmra.mrb[0].mxu0 %v2021
      %v2230 = vpop.f32.mrb[0].mxu0
      %v2231 = vadd.f32 %v1945, %v2230
      %v2232 = vpop.f32.mrb[0].mxu0
      %2233 = vmatprep.mubr.f32.mxu0 0.0
      %2234 = vmatmul.mubr.f32.gmra.mrb[0].mxu0 %v2024
      %v2235 = vpop.f32.mrb[0].mxu0
      %v2236 = vadd.f32 %v1945, %v2235
      %v2237 = vpop.f32.mrb[0].mxu0
      %2238 = vmatprep.mubr.f32.mxu0 0.0
      %2239 = vmatmul.mubr.f32.gmra.mrb[0].mxu0 %v2027
      %v2240 = vpop.f32.mrb[0].mxu0
      %v2241 = vadd.f32 %v1945, %v2240
      %v2242 = vpop.f32.mrb[0].mxu0
      %2243 = vmatprep.mubr.f32.mxu0 0.0
      %2244 = vmatmul.mubr.f32.gmra.mrb[0].mxu0 %v2030
      %v2245 = vpop.f32.mrb[0].mxu0
      %v2246 = vadd.f32 %v1945, %v2245
      %v2247 = vpop.f32.mrb[0].mxu0
      %2248 = vmatprep.mubr.f32.mxu0 0.0
      %2249 = vmatmul.mubr.f32.gmra.mrb[0].mxu0 %v2033
      %v2250 = vpop.f32.mrb[0].mxu0
      %v2251 = vadd.f32 %v1945, %v2250
      %v2252 = vpop.f32.mrb[0].mxu0
      %2253 = vmatprep.mubr.f32.mxu0 0.0
      %2254 = vmatmul.mubr.f32.gmra.mrb[0].mxu0 %v2036
      %v2255 = vpop.f32.mrb[0].mxu0
      %v2256 = vadd.f32 %v1945, %v2255
      %v2257 = vpop.f32.mrb[0].mxu0
      %2258 = vmatprep.mubr.f32.mxu0 0.0
      %2259 = vmatmul.mubr.f32.gmra.mrb[0].mxu0 %v2039
      %v2260 = vpop.f32.mrb[0].mxu0
      %v2261 = vadd.f32 %v1945, %v2260
      %v2262 = vpop.f32.mrb[0].mxu0
      %2263 = vmatprep.mubr.f32.mxu0 0.0
      %2264 = vmatmul.mubr.f32.gmra.mrb[0].mxu0 %v2042
      %v2265 = vpop.f32.mrb[0].mxu0
      %v2266 = vadd.f32 %v1945, %v2265
      %v2267 = vpop.f32.mrb[0].mxu0
      %2268 = vdwg.mxu0
      %2269 = vst [vmem:[%s195] sm:$0xff] %v2111
      %2270 = vst [vmem:[%s195 + $0x8] sm:$0xff] %v2116
      %2271 = vst [vmem:[%s195 + $0x10] sm:$0xff] %v2121
      %2272 = vst [vmem:[%s195 + $0x18] sm:$0xff] %v2126
      %2273 = vst [vmem:[%s195 + $0x20] sm:$0xff] %v2131
      %2274 = vst [vmem:[%s195 + $0x28] sm:$0xff] %v2136
      %2275 = vst [vmem:[%s195 + $0x30] sm:$0xff] %v2141
      %2276 = vst [vmem:[%s195 + $0x38] sm:$0xff] %v2146
      %2277 = vst [vmem:[%s195 + $0x40] sm:$0xff] %v2151
      %2278 = vst [vmem:[%s195 + $0x48] sm:$0xff] %v2156
      %2279 = vst [vmem:[%s195 + $0x50] sm:$0xff] %v2161
      %2280 = vst [vmem:[%s195 + $0x58] sm:$0xff] %v2166
      %2281 = vst [vmem:[%s195 + $0x60] sm:$0xff] %v2171
      %2282 = vst [vmem:[%s195 + $0x68] sm:$0xff] %v2176
      %2283 = vst [vmem:[%s195 + $0x70] sm:$0xff] %v2181
      %2284 = vst [vmem:[%s195 + $0x78] sm:$0xff] %v2186
      %2285 = vst [vmem:[%s195 + $0x80] sm:$0xff] %v2191
      %2286 = vst [vmem:[%s195 + $0x88] sm:$0xff] %v2196
      %2287 = vst [vmem:[%s195 + $0x90] sm:$0xff] %v2201
      %2288 = vst [vmem:[%s195 + $0x98] sm:$0xff] %v2206
      %2289 = vst [vmem:[%s195 + $0xa0] sm:$0xff] %v2211
      %2290 = vst [vmem:[%s195 + $0xa8] sm:$0xff] %v2216
      %2291 = vst [vmem:[%s195 + $0xb0] sm:$0xff] %v2221
      %2292 = vst [vmem:[%s195 + $0xb8] sm:$0xff] %v2226
      %2293 = vst [vmem:[%s195 + $0xc0] sm:$0xff] %v2231
      %2294 = vst [vmem:[%s195 + $0xc8] sm:$0xff] %v2236
      %2295 = vst [vmem:[%s195 + $0xd0] sm:$0xff] %v2241
      %2296 = vst [vmem:[%s195 + $0xd8] sm:$0xff] %v2246
      %2297 = vst [vmem:[%s195 + $0xe0] sm:$0xff] %v2251
      %2298 = vst [vmem:[%s195 + $0xe8] sm:$0xff] %v2256
      %2299 = vst [vmem:[%s195 + $0xf0] sm:$0xff] %v2261
      %2300 = vst [vmem:[%s195 + $0xf8] sm:$0xff] %v2266
      %v2301 = vadd.f32 %v2111, %v2116
      %v2302 = vadd.f32 %v2301, %v2121
      %v2303 = vadd.f32 %v2302, %v2126
      %v2304 = vadd.f32 %v2303, %v2131
      %v2305 = vadd.f32 %v2304, %v2136
      %v2306 = vadd.f32 %v2305, %v2141
      %v2307 = vadd.f32 %v2306, %v2146
      %v2308 = vadd.f32 %v2307, %v2151
      %v2309 = vadd.f32 %v2308, %v2156
      %v2310 = vadd.f32 %v2309, %v2161
      %v2311 = vadd.f32 %v2310, %v2166
      %v2312 = vadd.f32 %v2311, %v2171
      %v2313 = vadd.f32 %v2312, %v2176
      %v2314 = vadd.f32 %v2313, %v2181
      %v2315 = vadd.f32 %v2314, %v2186
      %v2316 = vadd.f32 %v2315, %v2191
      %v2317 = vadd.f32 %v2316, %v2196
      %v2318 = vadd.f32 %v2317, %v2201
      %v2319 = vadd.f32 %v2318, %v2206
      %v2320 = vadd.f32 %v2319, %v2211
      %v2321 = vadd.f32 %v2320, %v2216
      %v2322 = vadd.f32 %v2321, %v2221
      %v2323 = vadd.f32 %v2322, %v2226
      %v2324 = vadd.f32 %v2323, %v2231
      %v2325 = vadd.f32 %v2324, %v2236
      %v2326 = vadd.f32 %v2325, %v2241
      %v2327 = vadd.f32 %v2326, %v2246
      %v2328 = vadd.f32 %v2327, %v2251
      %v2329 = vadd.f32 %v2328, %v2256
      %v2330 = vadd.f32 %v2329, %v2261
      %v2331 = vadd.f32 %v2330, %v2266
      %v2332 = vrot.slane %v2331, 4
      %v2333 = vadd.f32 %v2331, %v2332
      %v2334 = vrot.slane %v2333, 2
      %v2335 = vadd.f32 %v2333, %v2334
      %v2336 = vrot.slane %v2335, 1
      %v2337 = vadd.f32 %v2335, %v2336
      %v2338 = vmul.f32 %v2111, %v2111
      %v2339 = vmul.f32 %v2116, %v2116
      %v2340 = vmul.f32 %v2121, %v2121
      %v2341 = vmul.f32 %v2126, %v2126
      %v2342 = vmul.f32 %v2131, %v2131
      %v2343 = vmul.f32 %v2136, %v2136
      %v2344 = vmul.f32 %v2141, %v2141
      %v2345 = vmul.f32 %v2146, %v2146
      %v2346 = vmul.f32 %v2151, %v2151
      %v2347 = vmul.f32 %v2156, %v2156
      %v2348 = vmul.f32 %v2161, %v2161
      %v2349 = vmul.f32 %v2166, %v2166
      %v2350 = vmul.f32 %v2171, %v2171
      %v2351 = vmul.f32 %v2176, %v2176
      %v2352 = vmul.f32 %v2181, %v2181
      %v2353 = vmul.f32 %v2186, %v2186
      %v2354 = vmul.f32 %v2191, %v2191
      %v2355 = vmul.f32 %v2196, %v2196
      %v2356 = vmul.f32 %v2201, %v2201
      %v2357 = vmul.f32 %v2206, %v2206
      %v2358 = vmul.f32 %v2211, %v2211
      %v2359 = vmul.f32 %v2216, %v2216
      %v2360 = vmul.f32 %v2221, %v2221
      %v2361 = vmul.f32 %v2226, %v2226
      %v2362 = vmul.f32 %v2231, %v2231
      %v2363 = vmul.f32 %v2236, %v2236
      %v2364 = vmul.f32 %v2241, %v2241
      %v2365 = vmul.f32 %v2246, %v2246
      %v2366 = vmul.f32 %v2251, %v2251
      %v2367 = vmul.f32 %v2256, %v2256
      %v2368 = vmul.f32 %v2261, %v2261
      %v2369 = vmul.f32 %v2266, %v2266
      %v2370 = vadd.f32 %v2338, %v2339
      %v2371 = vadd.f32 %v2370, %v2340
      %v2372 = vadd.f32 %v2371, %v2341
      %v2373 = vadd.f32 %v2372, %v2342
      %v2374 = vadd.f32 %v2373, %v2343
      %v2375 = vadd.f32 %v2374, %v2344
      %v2376 = vadd.f32 %v2375, %v2345
      %v2377 = vadd.f32 %v2376, %v2346
      %v2378 = vadd.f32 %v2377, %v2347
      %v2379 = vadd.f32 %v2378, %v2348
      %v2380 = vadd.f32 %v2379, %v2349
      %v2381 = vadd.f32 %v2380, %v2350
      %v2382 = vadd.f32 %v2381, %v2351
      %v2383 = vadd.f32 %v2382, %v2352
      %v2384 = vadd.f32 %v2383, %v2353
      %v2385 = vadd.f32 %v2384, %v2354
      %v2386 = vadd.f32 %v2385, %v2355
      %v2387 = vadd.f32 %v2386, %v2356
      %v2388 = vadd.f32 %v2387, %v2357
      %v2389 = vadd.f32 %v2388, %v2358
      %v2390 = vadd.f32 %v2389, %v2359
      %v2391 = vadd.f32 %v2390, %v2360
      %v2392 = vadd.f32 %v2391, %v2361
      %v2393 = vadd.f32 %v2392, %v2362
      %v2394 = vadd.f32 %v2393, %v2363
      %v2395 = vadd.f32 %v2394, %v2364
      %v2396 = vadd.f32 %v2395, %v2365
      %v2397 = vadd.f32 %v2396, %v2366
      %v2398 = vadd.f32 %v2397, %v2367
      %v2399 = vadd.f32 %v2398, %v2368
      %v2400 = vadd.f32 %v2399, %v2369
      %v2401 = vrot.slane %v2400, 4
      %v2402 = vadd.f32 %v2400, %v2401
      %v2403 = vrot.slane %v2402, 2
      %v2404 = vadd.f32 %v2402, %v2403
      %v2405 = vrot.slane %v2404, 1
      %v2406 = vadd.f32 %v2404, %v2405
      %v2407 = vld [vmem:[%s4] sm:$0x3]
      %vm2408 = vcmask 1040384
      %v2409 = vsel %vm2408, %v2337, %v2406
      %v2410 = vadd.f32 %v2407, %v2409
      %2411 = vst [vmem:[%s4] sm:$0x3] %v2410
      %p2412 = scmp.lt.s32.totalorder %s16, 1
      %s2413 = scalar_select %p2412, %s16, 1
      %s2414 = smul.addr %s2413, 32
      %s2415 = smul.addr %s2414, 8
      %s2416 = scalar_lea.vmem %s3, %s2415
      // Predicated region
      $region37: #{deconv_block_forward.2} parent=31 // pred_check
        %p2417 = pneg %p102
      $region38: #{deconv_block_forward.2} parent=31 // pred_check_branch
        %2419 = sbr.rel (%p2417) target = $region40
      $region39: #{deconv_block_forward.2} parent=31 // pred_region
        _
      $region40: #{deconv_block_forward.2} parent=31 // pred_fallthru
        _
      // Predicated region
      $region41: #{deconv_block_forward.2} parent=31 // pred_check
        %p2420 = pneg %p123
      $region42: #{deconv_block_forward.2} parent=31 // pred_check_branch
        %2422 = sbr.rel (%p2420) target = $region44
      $region43: #{deconv_block_forward.2} parent=31 // pred_region
        _
      $region44: #{deconv_block_forward.2} parent=31 // pred_fallthru
        _
      // Predicated region
      $region45: #{deconv_block_forward.2} parent=31 // pred_check
        %p2423 = pneg %p123
      $region46: #{deconv_block_forward.2} parent=31 // pred_check_branch
        %2425 = sbr.rel (%p2423) target = $region48
      $region47: #{deconv_block_forward.2} parent=31 // pred_region
        _
      $region48: #{deconv_block_forward.2} parent=31 // pred_fallthru
        _
    $region32: #{deconv_block_forward.2} parent=5 // pred_fallthru
      _
    %p2426 = scmp.le.s32.totalorder 2, %s11
    // Predicated region
    $region49: #{deconv_block_forward.2} parent=5 // pred_check
      %p2427 = pneg %p2426
    $region50: #{deconv_block_forward.2} parent=5 // pred_check_branch
      %2429 = sbr.rel (%p2427) target = $region52
    $region51: #{deconv_block_forward.2} parent=5 // pred_region
      %s2430 = ssub.s32 %s11, 2
      // Predicated region
      $region53: #{deconv_block_forward.2} parent=51 // pred_check
        %p2431 = pneg %p108
      $region54: #{deconv_block_forward.2} parent=51 // pred_check_branch
        %2433 = sbr.rel (%p2431) target = $region56
      $region55: #{deconv_block_forward.2} parent=51 // pred_region
        %p2434 = scmp.lt.s32.totalorder %s17, 1
        %s2435 = scalar_select %p2434, %s17, 1
        %s2436 = smul.addr %s2435, 32
        %s2437 = smul.addr %s2436, 8
        %s2438 = scalar_lea.vmem %s3, %s2437
      $region56: #{deconv_block_forward.2} parent=51 // pred_fallthru
        _
    $region52: #{deconv_block_forward.2} parent=5 // pred_fallthru
      _
  $region6: #{deconv_block_forward.2} parent=0 // loop_footer
    %s15 = sadd.s32 1, %s11
  $region7: #{deconv_block_forward.2} parent=0 // loop_footer_branch
    %10 = sbr.rel target = $region3
  $region8: #{deconv_block_forward.2} parent=0 // loop_exit
    _

</llo_original>
